<compile_context>
chip_gen: v7x
topology: tpu7x:2x2x1
jax: 0.10.0
libtpu: 0.0.40
codegen_flags: <defaults>
</compile_context>

<pallas_src>
import math
import numpy as np
import jax
import jax.numpy as jnp
from jax import lax
from jax.experimental import pallas as pl
from jax.experimental.pallas import tpu as pltpu

CONV_CFG = [  # (Cin, Cout, K) matching the nn.Sequential in CNN1d_low
    (1, 16, 5), (16, 16, 5), (16, 32, 3), (32, 32, 3), (32, 64, 3), (64, 64, 3),
]
POOL_OUT = 64
BN_EPS = 1e-5
SHRINK = sum(k - 1 for (_, _, k) in CONV_CFG)  # total receptive-field shrink = 16


# ----------------------------- kernel helpers -------------------------------

def _bn_silu(z, bn_ref):
    # z: (Cout, W) f32; bn_ref: (Cout, 2) f32 with [:,0]=scale, [:,1]=shift.
    # BN affine + SiLU in f32, then downcast to bf16 so the next layer's im2col
    # copies and MXU operands are half-width.
    z = z * bn_ref[:, 0:1] + bn_ref[:, 1:2]
    return (z * jax.nn.sigmoid(z)).astype(jnp.bfloat16)


def _conv_bn_silu(y, w_ref, bn_ref, K):
    # y: (Cin, Win) bf16 lane-dense multi-sample activation; w_ref: (Cout, Cin*K) bf16.
    # im2col: one MXU matmul per layer (bf16 inputs, f32 accumulation).
    Cin, Win = y.shape
    W = Win - (K - 1)
    xcol = jnp.concatenate([y[:, k:k + W] for k in range(K)], axis=0)  # (Cin*K, W) bf16
    z = jnp.dot(w_ref[...], xcol, preferred_element_type=jnp.float32)  # (Cout, W) f32
    return _bn_silu(z, bn_ref)


def _make_kernel(b_tile, L0):
    L6 = L0 - SHRINK

    def kernel(x_ref,
               w1, bn1, w2, bn2, w3, bn3, w4, bn4, w5, bn5, w6, bn6,
               pool_ref, out_ref):
        y0 = x_ref[0]                      # (1, b_tile*L0) f32, samples at stride L0
        W0 = y0.shape[1]

        # Layer 1: Cin = 1 -> contraction length 1; VPU broadcast MAC (f32),
        # keeping the MXU free.
        K1 = 5
        W1 = W0 - (K1 - 1)
        acc = w1[:, 0:1] * y0[0:1, 0:W1]
        for k in range(1, K1):
            acc = acc + w1[:, k:k + 1] * y0[0:1, k:k + W1]
        y = _bn_silu(acc, bn1)             # (16, W1) bf16

        y = _conv_bn_silu(y, w2, bn2, 5)   # (16, W2)
        y = _conv_bn_silu(y, w3, bn3, 3)   # (32, W3)
        y = _conv_bn_silu(y, w4, bn4, 3)   # (32, W4)
        y = _conv_bn_silu(y, w5, bn5, 3)   # (64, W5)
        y = _conv_bn_silu(y, w6, bn6, 3)   # (64, b_tile*L0 - 16) bf16

        # AdaptiveAvgPool1d(64): one small (64, L6) @ (L6, 64) dot per sample
        # (shared averaging matrix) instead of a ~90%-zero block-diagonal matmul.
        # Only each sample's valid L6 lanes are read (no 0*garbage hazard); the
        # per-sample results are lane-concatenated and stored as one lane-dense
        # (64, b_tile*64) block.
        pooled = [jnp.dot(y[:, b * L0: b * L0 + L6], pool_ref[...],
                          preferred_element_type=jnp.float32)
                  for b in range(b_tile)]
        out_ref[0] = jnp.concatenate(pooled, axis=1)

    return kernel


# ------------------------------- wrapper -------------------------------------

def adaptive_pool_matrix(L, out=POOL_OUT):
    """PyTorch AdaptiveAvgPool1d bin-averaging matrix, shape (L, out), numpy."""
    P = np.zeros((L, out), np.float32)
    for i in range(out):
        s = (i * L) // out
        e = -(-((i + 1) * L) // out)             # ceil
        P[s:e, i] = 1.0 / (e - s)
    return P


def cnn1d_low_forward(x, params, b_tile=16):
    """x: (N, 1, L0) f32 -> (N, 64, 64) f32.  b_tile samples per grid step,
    concatenated along the lane axis at stride L0."""
    N, cin, L0 = x.shape
    assert cin == 1 and L0 > SHRINK

    # Megacore (v7x): keep T >= 2 whenever N >= 2 so ("parallel",) can shard
    # the grid across both TensorCores.
    if N >= 2:
        b_tile = min(b_tile, -(-N // 2))
    b_tile = max(1, min(b_tile, N))
    n_pad = -(-N // b_tile) * b_tile
    T = n_pad // b_tile

    x2 = x[:, 0, :]                                      # (N, L0)
    if n_pad != N:
        x2 = jnp.pad(x2, ((0, n_pad - N), (0, 0)))       # pad batch with zeros
    x2 = x2.reshape(T, 1, b_tile * L0)                   # samples at stride L0

    L6 = L0 - SHRINK
    pool = jnp.asarray(adaptive_pool_matrix(L6), dtype=jnp.bfloat16)   # (L6, 64)

    flat = []
    in_specs = [pl.BlockSpec((1, 1, b_tile * L0), lambda t: (t, 0, 0))]
    for (w_col, bn, _, _) in params:
        flat += [w_col, bn]
        in_specs += [pl.BlockSpec(w_col.shape, lambda t: (0, 0)),
                     pl.BlockSpec(bn.shape, lambda t: (0, 0))]
    flat.append(pool)
    in_specs.append(pl.BlockSpec(pool.shape, lambda t: (0, 0)))

    # Advisory cost estimate for XLA scheduling.
    flops = 0
    trans = 0
    w_cur = b_tile * L0
    for (ci, co, k) in CONV_CFG:
        w_cur -= (k - 1)
        flops += 2 * co * w_cur * (ci * k) * T
        trans += co * w_cur * T
    flops += 2 * 64 * L6 * POOL_OUT * b_tile * T
    param_bytes = sum(int(w.size) * w.dtype.itemsize + int(bn.size) * 4
                      for (w, bn, _, _) in params) + int(pool.size) * 2
    bytes_accessed = int(x2.size) * 4 + n_pad * 64 * POOL_OUT * 4 + param_bytes

    out = pl.pallas_call(
        _make_kernel(b_tile, L0),
        out_shape=jax.ShapeDtypeStruct((T, 64, b_tile * POOL_OUT), jnp.float32),
        grid=(T,),
        in_specs=in_specs,
        out_specs=pl.BlockSpec((1, 64, b_tile * POOL_OUT), lambda t: (t, 0, 0)),
        compiler_params=pltpu.CompilerParams(
            dimension_semantics=("parallel",),
            vmem_limit_bytes=32 * 1024 * 1024),
        cost_estimate=pl.CostEstimate(flops=int(flops),
                                      transcendentals=int(trans),
                                      bytes_accessed=int(bytes_accessed)),
    )(x2, *flat)

    # (T, 64, b_tile*64) -> (N, 64, 64)
    # TODO(synk): this HBM-side transpose could be dropped if the consumer
    # accepted the kernel's native lane-dense (64, b_tile*64) layout.
    out = out.reshape(T, 64, b_tile, POOL_OUT).transpose(0, 2, 1, 3)
    return out.reshape(n_pad, 64, POOL_OUT)[:N]


# ---------------------------- params & reference -----------------------------

def init_params(key):
    """Deterministic synthetic parameters; BatchNorm (eval) folded with the conv
    bias into per-channel (scale, shift).  Weights stored im2col-style as
    (Cout, K*Cin); MXU-fed layers (Cin > 1) are stored in bf16."""
    params = []
    for (cin, cout, k) in CONV_CFG:
        key, k1, k2, k3, k4, k5, k6 = jax.random.split(key, 7)
        bound = 1.0 / math.sqrt(cin * k)
        w = jax.random.uniform(k1, (cout, cin, k), jnp.float32, -bound, bound)
        b = jax.random.uniform(k2, (cout,), jnp.float32, -bound, bound)
        gamma = jax.random.uniform(k3, (cout,), jnp.float32, 0.5, 1.5)
        beta = jax.random.uniform(k4, (cout,), jnp.float32, -0.1, 0.1)
        rmean = jax.random.uniform(k5, (cout,), jnp.float32, -0.1, 0.1)
        rvar = jax.random.uniform(k6, (cout,), jnp.float32, 0.5, 1.5)
        # TODO(synk): training-mode BatchNorm (batch statistics) not implemented;
        # this reproduces eval-mode semantics with running stats.
        scale = gamma / jnp.sqrt(rvar + BN_EPS)
        shift = (b - rmean) * scale + beta
        w_col = jnp.transpose(w, (0, 2, 1)).reshape(cout, k * cin)  # (Cout, K*Cin)
        if cin > 1:                       # layers 2..6 feed the MXU -> bf16 operands
            w_col = w_col.astype(jnp.bfloat16)
        bn = jnp.stack([scale, shift], axis=1)                      # (Cout, 2) f32
        params.append((w_col, bn, k, cin))
    return params


def ref_forward(x, params):
    """Pure-f32 reference of the PyTorch forward (using the same effective weights)."""
    y = x
    for (w_col, bn, k, cin) in params:
        cout = w_col.shape[0]
        w = w_col.astype(jnp.float32).reshape(cout, k, cin).transpose(0, 2, 1)
        y = lax.conv_general_dilated(
            y, w, window_strides=(1,), padding='VALID',
            dimension_numbers=('NCH', 'OIH', 'NCH'))
        y = y * bn[:, 0][None, :, None] + bn[:, 1][None, :, None]
        y = y * jax.nn.sigmoid(y)
    L6 = y.shape[-1]
    P = jnp.asarray(adaptive_pool_matrix(L6))
    return jnp.einsum('ncl,lo->nco', y, P)


if __name__ == "__main__":
    key = jax.random.PRNGKey(0)
    key, xk1, xk2 = jax.random.split(key, 3)
    params = init_params(key)
    L0 = 96

    # Config 1 (N=2): b_tile is auto-capped to 1 -> grid T=2 (both TCs on v7x).
    N1 = 2
    x1 = jax.random.normal(xk1, (N1, 1, L0), jnp.float32)
    out1 = jax.block_until_ready(cnn1d_low_forward(x1, params))
    ref1 = ref_forward(x1, params)
    assert out1.shape == (N1, 64, POOL_OUT)
    # bf16 MXU operands (f32 accumulation) -> slightly widened tolerance vs f32 ref.
    np.testing.assert_allclose(np.asarray(out1), np.asarray(ref1),
                               rtol=3e-2, atol=3e-2)

    # Config 2 (N=10, b_tile=4 -> T=3): exercises multi-sample lane tiles,
    # per-sample pooling slices and batch padding.
    N2 = 10
    x2 = jax.random.normal(xk2, (N2, 1, L0), jnp.float32)
    out2 = jax.block_until_ready(cnn1d_low_forward(x2, params, b_tile=4))
    ref2 = ref_forward(x2, params)
    assert out2.shape == (N2, 64, POOL_OUT)
    np.testing.assert_allclose(np.asarray(out2), np.asarray(ref2),
                               rtol=3e-2, atol=3e-2)

    print("KERNEL_OK")
</pallas_src>

<mosaic_0001>
module attributes {stable_mosaic.version = 11 : i64} {
  func.func @kernel(%arg0: i32, %arg1: memref<1x1x96xf32, #tpu.memory_space<vmem>>, %arg2: memref<16x5xf32, #tpu.memory_space<vmem>>, %arg3: memref<16x2xf32, #tpu.memory_space<vmem>>, %arg4: memref<16x80xbf16, #tpu.memory_space<vmem>>, %arg5: memref<16x2xf32, #tpu.memory_space<vmem>>, %arg6: memref<32x48xbf16, #tpu.memory_space<vmem>>, %arg7: memref<32x2xf32, #tpu.memory_space<vmem>>, %arg8: memref<32x96xbf16, #tpu.memory_space<vmem>>, %arg9: memref<32x2xf32, #tpu.memory_space<vmem>>, %arg10: memref<64x96xbf16, #tpu.memory_space<vmem>>, %arg11: memref<64x2xf32, #tpu.memory_space<vmem>>, %arg12: memref<64x192xbf16, #tpu.memory_space<vmem>>, %arg13: memref<64x2xf32, #tpu.memory_space<vmem>>, %arg14: memref<80x64xbf16, #tpu.memory_space<vmem>>, %arg15: memref<1x64x64xf32, #tpu.memory_space<vmem>>) attributes {dimension_semantics = [#tpu.dimension_semantics<parallel>], iteration_bounds = array<i64: 2>, scalar_prefetch = 0 : i64, scratch_operands = 0 : i64, tpu.core_type = #tpu.core_type<tc>, window_params = [{transform_indices = @transform_0, window_bounds = array<i64: 1, 1, 96>}, {pipeline_mode = #tpu.pipeline_mode<synchronous>, transform_indices = @transform_1, window_bounds = array<i64: 16, 5>}, {pipeline_mode = #tpu.pipeline_mode<synchronous>, transform_indices = @transform_2, window_bounds = array<i64: 16, 2>}, {pipeline_mode = #tpu.pipeline_mode<synchronous>, transform_indices = @transform_3, window_bounds = array<i64: 16, 80>}, {pipeline_mode = #tpu.pipeline_mode<synchronous>, transform_indices = @transform_4, window_bounds = array<i64: 16, 2>}, {pipeline_mode = #tpu.pipeline_mode<synchronous>, transform_indices = @transform_5, window_bounds = array<i64: 32, 48>}, {pipeline_mode = #tpu.pipeline_mode<synchronous>, transform_indices = @transform_6, window_bounds = array<i64: 32, 2>}, {pipeline_mode = #tpu.pipeline_mode<synchronous>, transform_indices = @transform_7, window_bounds = array<i64: 32, 96>}, {pipeline_mode = #tpu.pipeline_mode<synchronous>, transform_indices = @transform_8, window_bounds = array<i64: 32, 2>}, {pipeline_mode = #tpu.pipeline_mode<synchronous>, transform_indices = @transform_9, window_bounds = array<i64: 64, 96>}, {pipeline_mode = #tpu.pipeline_mode<synchronous>, transform_indices = @transform_10, window_bounds = array<i64: 64, 2>}, {pipeline_mode = #tpu.pipeline_mode<synchronous>, transform_indices = @transform_11, window_bounds = array<i64: 64, 192>}, {pipeline_mode = #tpu.pipeline_mode<synchronous>, transform_indices = @transform_12, window_bounds = array<i64: 64, 2>}, {pipeline_mode = #tpu.pipeline_mode<synchronous>, transform_indices = @transform_13, window_bounds = array<i64: 80, 64>}, {transform_indices = @transform_14, window_bounds = array<i64: 1, 64, 64>}]} {
    %c0 = arith.constant 0 : index
    %c0_0 = arith.constant 0 : index
    %c0_1 = arith.constant 0 : index
    %0 = vector.load %arg1[%c0, %c0_0, %c0_1] : memref<1x1x96xf32, #tpu.memory_space<vmem>>, vector<1x1x96xf32>
    %1 = vector.shape_cast %0 : vector<1x1x96xf32> to vector<1x96xf32>
    %c0_2 = arith.constant 0 : index
    %c0_3 = arith.constant 0 : index
    %2 = vector.load %arg2[%c0_2, %c0_3] : memref<16x5xf32, #tpu.memory_space<vmem>>, vector<16x1xf32>
    %3 = vector.extract_strided_slice %1 {offsets = [0, 0], sizes = [1, 92], strides = [1, 1]} : vector<1x96xf32> to vector<1x92xf32>
    %4 = vector.broadcast %2 : vector<16x1xf32> to vector<16x92xf32>
    %5 = vector.broadcast %3 : vector<1x92xf32> to vector<16x92xf32>
    %6 = arith.mulf %4, %5 : vector<16x92xf32>
    %c0_4 = arith.constant 0 : index
    %c1 = arith.constant 1 : index
    %7 = vector.load %arg2[%c0_4, %c1] : memref<16x5xf32, #tpu.memory_space<vmem>>, vector<16x1xf32>
    %8 = vector.extract_strided_slice %1 {offsets = [0, 1], sizes = [1, 92], strides = [1, 1]} : vector<1x96xf32> to vector<1x92xf32>
    %9 = vector.broadcast %7 : vector<16x1xf32> to vector<16x92xf32>
    %10 = vector.broadcast %8 : vector<1x92xf32> to vector<16x92xf32>
    %11 = arith.mulf %9, %10 : vector<16x92xf32>
    %12 = arith.addf %6, %11 : vector<16x92xf32>
    %c0_5 = arith.constant 0 : index
    %c2 = arith.constant 2 : index
    %13 = vector.load %arg2[%c0_5, %c2] : memref<16x5xf32, #tpu.memory_space<vmem>>, vector<16x1xf32>
    %14 = vector.extract_strided_slice %1 {offsets = [0, 2], sizes = [1, 92], strides = [1, 1]} : vector<1x96xf32> to vector<1x92xf32>
    %15 = vector.broadcast %13 : vector<16x1xf32> to vector<16x92xf32>
    %16 = vector.broadcast %14 : vector<1x92xf32> to vector<16x92xf32>
    %17 = arith.mulf %15, %16 : vector<16x92xf32>
    %18 = arith.addf %12, %17 : vector<16x92xf32>
    %c0_6 = arith.constant 0 : index
    %c3 = arith.constant 3 : index
    %19 = vector.load %arg2[%c0_6, %c3] : memref<16x5xf32, #tpu.memory_space<vmem>>, vector<16x1xf32>
    %20 = vector.extract_strided_slice %1 {offsets = [0, 3], sizes = [1, 92], strides = [1, 1]} : vector<1x96xf32> to vector<1x92xf32>
    %21 = vector.broadcast %19 : vector<16x1xf32> to vector<16x92xf32>
    %22 = vector.broadcast %20 : vector<1x92xf32> to vector<16x92xf32>
    %23 = arith.mulf %21, %22 : vector<16x92xf32>
    %24 = arith.addf %18, %23 : vector<16x92xf32>
    %c0_7 = arith.constant 0 : index
    %c4 = arith.constant 4 : index
    %25 = vector.load %arg2[%c0_7, %c4] : memref<16x5xf32, #tpu.memory_space<vmem>>, vector<16x1xf32>
    %26 = vector.extract_strided_slice %1 {offsets = [0, 4], sizes = [1, 92], strides = [1, 1]} : vector<1x96xf32> to vector<1x92xf32>
    %27 = vector.broadcast %25 : vector<16x1xf32> to vector<16x92xf32>
    %28 = vector.broadcast %26 : vector<1x92xf32> to vector<16x92xf32>
    %29 = arith.mulf %27, %28 : vector<16x92xf32>
    %30 = arith.addf %24, %29 : vector<16x92xf32>
    %c0_8 = arith.constant 0 : index
    %c0_9 = arith.constant 0 : index
    %31 = vector.load %arg3[%c0_8, %c0_9] : memref<16x2xf32, #tpu.memory_space<vmem>>, vector<16x1xf32>
    %32 = vector.broadcast %31 : vector<16x1xf32> to vector<16x92xf32>
    %33 = arith.mulf %30, %32 : vector<16x92xf32>
    %c0_10 = arith.constant 0 : index
    %c1_11 = arith.constant 1 : index
    %34 = vector.load %arg3[%c0_10, %c1_11] : memref<16x2xf32, #tpu.memory_space<vmem>>, vector<16x1xf32>
    %35 = vector.broadcast %34 : vector<16x1xf32> to vector<16x92xf32>
    %36 = arith.addf %33, %35 : vector<16x92xf32>
    %37 = arith.negf %36 : vector<16x92xf32>
    %38 = math.exp %37 : vector<16x92xf32>
    %cst = arith.constant 1.000000e+00 : f32
    %39 = vector.broadcast %cst : f32 to vector<16x92xf32>
    %40 = arith.addf %39, %38 : vector<16x92xf32>
    %41 = arith.divf %39, %40 : vector<16x92xf32>
    %42 = arith.mulf %36, %41 : vector<16x92xf32>
    %43 = arith.truncf %42 : vector<16x92xf32> to vector<16x92xbf16>
    %44 = vector.extract_strided_slice %43 {offsets = [0, 0], sizes = [16, 88], strides = [1, 1]} : vector<16x92xbf16> to vector<16x88xbf16>
    %45 = vector.extract_strided_slice %43 {offsets = [0, 1], sizes = [16, 88], strides = [1, 1]} : vector<16x92xbf16> to vector<16x88xbf16>
    %46 = vector.extract_strided_slice %43 {offsets = [0, 2], sizes = [16, 88], strides = [1, 1]} : vector<16x92xbf16> to vector<16x88xbf16>
    %47 = vector.extract_strided_slice %43 {offsets = [0, 3], sizes = [16, 88], strides = [1, 1]} : vector<16x92xbf16> to vector<16x88xbf16>
    %48 = vector.extract_strided_slice %43 {offsets = [0, 4], sizes = [16, 88], strides = [1, 1]} : vector<16x92xbf16> to vector<16x88xbf16>
    %49 = tpu.concatenate %44, %45, %46, %47, %48 in 0 : vector<16x88xbf16>, vector<16x88xbf16>, vector<16x88xbf16>, vector<16x88xbf16>, vector<16x88xbf16> -> vector<80x88xbf16>
    %c0_12 = arith.constant 0 : index
    %c0_13 = arith.constant 0 : index
    %50 = vector.load %arg4[%c0_12, %c0_13] : memref<16x80xbf16, #tpu.memory_space<vmem>>, vector<16x80xbf16>
    %cst_14 = arith.constant dense<0.000000e+00> : vector<16x88xf32>
    %51 = tpu.matmul %50, %49, %cst_14 {dimension_numbers = #tpu.dot_dimension_numbers<[1], [0], [0], [1], [0, 0, 1, 1], [], []>} : vector<16x80xbf16>, vector<80x88xbf16>, vector<16x88xf32> -> vector<16x88xf32>
    %c0_15 = arith.constant 0 : index
    %c0_16 = arith.constant 0 : index
    %52 = vector.load %arg5[%c0_15, %c0_16] : memref<16x2xf32, #tpu.memory_space<vmem>>, vector<16x1xf32>
    %53 = vector.broadcast %52 : vector<16x1xf32> to vector<16x88xf32>
    %54 = arith.mulf %51, %53 : vector<16x88xf32>
    %c0_17 = arith.constant 0 : index
    %c1_18 = arith.constant 1 : index
    %55 = vector.load %arg5[%c0_17, %c1_18] : memref<16x2xf32, #tpu.memory_space<vmem>>, vector<16x1xf32>
    %56 = vector.broadcast %55 : vector<16x1xf32> to vector<16x88xf32>
    %57 = arith.addf %54, %56 : vector<16x88xf32>
    %58 = arith.negf %57 : vector<16x88xf32>
    %59 = math.exp %58 : vector<16x88xf32>
    %cst_19 = arith.constant 1.000000e+00 : f32
    %60 = vector.broadcast %cst_19 : f32 to vector<16x88xf32>
    %61 = arith.addf %60, %59 : vector<16x88xf32>
    %62 = arith.divf %60, %61 : vector<16x88xf32>
    %63 = arith.mulf %57, %62 : vector<16x88xf32>
    %64 = arith.truncf %63 : vector<16x88xf32> to vector<16x88xbf16>
    %65 = vector.extract_strided_slice %64 {offsets = [0, 0], sizes = [16, 86], strides = [1, 1]} : vector<16x88xbf16> to vector<16x86xbf16>
    %66 = vector.extract_strided_slice %64 {offsets = [0, 1], sizes = [16, 86], strides = [1, 1]} : vector<16x88xbf16> to vector<16x86xbf16>
    %67 = vector.extract_strided_slice %64 {offsets = [0, 2], sizes = [16, 86], strides = [1, 1]} : vector<16x88xbf16> to vector<16x86xbf16>
    %68 = tpu.concatenate %65, %66, %67 in 0 : vector<16x86xbf16>, vector<16x86xbf16>, vector<16x86xbf16> -> vector<48x86xbf16>
    %c0_20 = arith.constant 0 : index
    %c0_21 = arith.constant 0 : index
    %69 = vector.load %arg6[%c0_20, %c0_21] : memref<32x48xbf16, #tpu.memory_space<vmem>>, vector<32x48xbf16>
    %cst_22 = arith.constant dense<0.000000e+00> : vector<32x86xf32>
    %70 = tpu.matmul %69, %68, %cst_22 {dimension_numbers = #tpu.dot_dimension_numbers<[1], [0], [0], [1], [0, 0, 1, 1], [], []>} : vector<32x48xbf16>, vector<48x86xbf16>, vector<32x86xf32> -> vector<32x86xf32>
    %c0_23 = arith.constant 0 : index
    %c0_24 = arith.constant 0 : index
    %71 = vector.load %arg7[%c0_23, %c0_24] : memref<32x2xf32, #tpu.memory_space<vmem>>, vector<32x1xf32>
    %72 = vector.broadcast %71 : vector<32x1xf32> to vector<32x86xf32>
    %73 = arith.mulf %70, %72 : vector<32x86xf32>
    %c0_25 = arith.constant 0 : index
    %c1_26 = arith.constant 1 : index
    %74 = vector.load %arg7[%c0_25, %c1_26] : memref<32x2xf32, #tpu.memory_space<vmem>>, vector<32x1xf32>
    %75 = vector.broadcast %74 : vector<32x1xf32> to vector<32x86xf32>
    %76 = arith.addf %73, %75 : vector<32x86xf32>
    %77 = arith.negf %76 : vector<32x86xf32>
    %78 = math.exp %77 : vector<32x86xf32>
    %cst_27 = arith.constant 1.000000e+00 : f32
    %79 = vector.broadcast %cst_27 : f32 to vector<32x86xf32>
    %80 = arith.addf %79, %78 : vector<32x86xf32>
    %81 = arith.divf %79, %80 : vector<32x86xf32>
    %82 = arith.mulf %76, %81 : vector<32x86xf32>
    %83 = arith.truncf %82 : vector<32x86xf32> to vector<32x86xbf16>
    %84 = vector.extract_strided_slice %83 {offsets = [0, 0], sizes = [32, 84], strides = [1, 1]} : vector<32x86xbf16> to vector<32x84xbf16>
    %85 = vector.extract_strided_slice %83 {offsets = [0, 1], sizes = [32, 84], strides = [1, 1]} : vector<32x86xbf16> to vector<32x84xbf16>
    %86 = vector.extract_strided_slice %83 {offsets = [0, 2], sizes = [32, 84], strides = [1, 1]} : vector<32x86xbf16> to vector<32x84xbf16>
    %87 = tpu.concatenate %84, %85, %86 in 0 : vector<32x84xbf16>, vector<32x84xbf16>, vector<32x84xbf16> -> vector<96x84xbf16>
    %c0_28 = arith.constant 0 : index
    %c0_29 = arith.constant 0 : index
    %88 = vector.load %arg8[%c0_28, %c0_29] : memref<32x96xbf16, #tpu.memory_space<vmem>>, vector<32x96xbf16>
    %cst_30 = arith.constant dense<0.000000e+00> : vector<32x84xf32>
    %89 = tpu.matmul %88, %87, %cst_30 {dimension_numbers = #tpu.dot_dimension_numbers<[1], [0], [0], [1], [0, 0, 1, 1], [], []>} : vector<32x96xbf16>, vector<96x84xbf16>, vector<32x84xf32> -> vector<32x84xf32>
    %c0_31 = arith.constant 0 : index
    %c0_32 = arith.constant 0 : index
    %90 = vector.load %arg9[%c0_31, %c0_32] : memref<32x2xf32, #tpu.memory_space<vmem>>, vector<32x1xf32>
    %91 = vector.broadcast %90 : vector<32x1xf32> to vector<32x84xf32>
    %92 = arith.mulf %89, %91 : vector<32x84xf32>
    %c0_33 = arith.constant 0 : index
    %c1_34 = arith.constant 1 : index
    %93 = vector.load %arg9[%c0_33, %c1_34] : memref<32x2xf32, #tpu.memory_space<vmem>>, vector<32x1xf32>
    %94 = vector.broadcast %93 : vector<32x1xf32> to vector<32x84xf32>
    %95 = arith.addf %92, %94 : vector<32x84xf32>
    %96 = arith.negf %95 : vector<32x84xf32>
    %97 = math.exp %96 : vector<32x84xf32>
    %cst_35 = arith.constant 1.000000e+00 : f32
    %98 = vector.broadcast %cst_35 : f32 to vector<32x84xf32>
    %99 = arith.addf %98, %97 : vector<32x84xf32>
    %100 = arith.divf %98, %99 : vector<32x84xf32>
    %101 = arith.mulf %95, %100 : vector<32x84xf32>
    %102 = arith.truncf %101 : vector<32x84xf32> to vector<32x84xbf16>
    %103 = vector.extract_strided_slice %102 {offsets = [0, 0], sizes = [32, 82], strides = [1, 1]} : vector<32x84xbf16> to vector<32x82xbf16>
    %104 = vector.extract_strided_slice %102 {offsets = [0, 1], sizes = [32, 82], strides = [1, 1]} : vector<32x84xbf16> to vector<32x82xbf16>
    %105 = vector.extract_strided_slice %102 {offsets = [0, 2], sizes = [32, 82], strides = [1, 1]} : vector<32x84xbf16> to vector<32x82xbf16>
    %106 = tpu.concatenate %103, %104, %105 in 0 : vector<32x82xbf16>, vector<32x82xbf16>, vector<32x82xbf16> -> vector<96x82xbf16>
    %c0_36 = arith.constant 0 : index
    %c0_37 = arith.constant 0 : index
    %107 = vector.load %arg10[%c0_36, %c0_37] : memref<64x96xbf16, #tpu.memory_space<vmem>>, vector<64x96xbf16>
    %cst_38 = arith.constant dense<0.000000e+00> : vector<64x82xf32>
    %108 = tpu.matmul %107, %106, %cst_38 {dimension_numbers = #tpu.dot_dimension_numbers<[1], [0], [0], [1], [0, 0, 1, 1], [], []>} : vector<64x96xbf16>, vector<96x82xbf16>, vector<64x82xf32> -> vector<64x82xf32>
    %c0_39 = arith.constant 0 : index
    %c0_40 = arith.constant 0 : index
    %109 = vector.load %arg11[%c0_39, %c0_40] : memref<64x2xf32, #tpu.memory_space<vmem>>, vector<64x1xf32>
    %110 = vector.broadcast %109 : vector<64x1xf32> to vector<64x82xf32>
    %111 = arith.mulf %108, %110 : vector<64x82xf32>
    %c0_41 = arith.constant 0 : index
    %c1_42 = arith.constant 1 : index
    %112 = vector.load %arg11[%c0_41, %c1_42] : memref<64x2xf32, #tpu.memory_space<vmem>>, vector<64x1xf32>
    %113 = vector.broadcast %112 : vector<64x1xf32> to vector<64x82xf32>
    %114 = arith.addf %111, %113 : vector<64x82xf32>
    %115 = arith.negf %114 : vector<64x82xf32>
    %116 = math.exp %115 : vector<64x82xf32>
    %cst_43 = arith.constant 1.000000e+00 : f32
    %117 = vector.broadcast %cst_43 : f32 to vector<64x82xf32>
    %118 = arith.addf %117, %116 : vector<64x82xf32>
    %119 = arith.divf %117, %118 : vector<64x82xf32>
    %120 = arith.mulf %114, %119 : vector<64x82xf32>
    %121 = arith.truncf %120 : vector<64x82xf32> to vector<64x82xbf16>
    %122 = vector.extract_strided_slice %121 {offsets = [0, 0], sizes = [64, 80], strides = [1, 1]} : vector<64x82xbf16> to vector<64x80xbf16>
    %123 = vector.extract_strided_slice %121 {offsets = [0, 1], sizes = [64, 80], strides = [1, 1]} : vector<64x82xbf16> to vector<64x80xbf16>
    %124 = vector.extract_strided_slice %121 {offsets = [0, 2], sizes = [64, 80], strides = [1, 1]} : vector<64x82xbf16> to vector<64x80xbf16>
    %125 = tpu.concatenate %122, %123, %124 in 0 : vector<64x80xbf16>, vector<64x80xbf16>, vector<64x80xbf16> -> vector<192x80xbf16>
    %c0_44 = arith.constant 0 : index
    %c0_45 = arith.constant 0 : index
    %126 = vector.load %arg12[%c0_44, %c0_45] : memref<64x192xbf16, #tpu.memory_space<vmem>>, vector<64x192xbf16>
    %cst_46 = arith.constant dense<0.000000e+00> : vector<64x80xf32>
    %127 = tpu.matmul %126, %125, %cst_46 {dimension_numbers = #tpu.dot_dimension_numbers<[1], [0], [0], [1], [0, 0, 1, 1], [], []>} : vector<64x192xbf16>, vector<192x80xbf16>, vector<64x80xf32> -> vector<64x80xf32>
    %c0_47 = arith.constant 0 : index
    %c0_48 = arith.constant 0 : index
    %128 = vector.load %arg13[%c0_47, %c0_48] : memref<64x2xf32, #tpu.memory_space<vmem>>, vector<64x1xf32>
    %129 = vector.broadcast %128 : vector<64x1xf32> to vector<64x80xf32>
    %130 = arith.mulf %127, %129 : vector<64x80xf32>
    %c0_49 = arith.constant 0 : index
    %c1_50 = arith.constant 1 : index
    %131 = vector.load %arg13[%c0_49, %c1_50] : memref<64x2xf32, #tpu.memory_space<vmem>>, vector<64x1xf32>
    %132 = vector.broadcast %131 : vector<64x1xf32> to vector<64x80xf32>
    %133 = arith.addf %130, %132 : vector<64x80xf32>
    %134 = arith.negf %133 : vector<64x80xf32>
    %135 = math.exp %134 : vector<64x80xf32>
    %cst_51 = arith.constant 1.000000e+00 : f32
    %136 = vector.broadcast %cst_51 : f32 to vector<64x80xf32>
    %137 = arith.addf %136, %135 : vector<64x80xf32>
    %138 = arith.divf %136, %137 : vector<64x80xf32>
    %139 = arith.mulf %133, %138 : vector<64x80xf32>
    %140 = arith.truncf %139 : vector<64x80xf32> to vector<64x80xbf16>
    %c0_52 = arith.constant 0 : index
    %c0_53 = arith.constant 0 : index
    %141 = vector.load %arg14[%c0_52, %c0_53] : memref<80x64xbf16, #tpu.memory_space<vmem>>, vector<80x64xbf16>
    %cst_54 = arith.constant dense<0.000000e+00> : vector<64x64xf32>
    %142 = tpu.matmul %140, %141, %cst_54 {dimension_numbers = #tpu.dot_dimension_numbers<[1], [0], [0], [1], [0, 0, 1, 1], [], []>} : vector<64x80xbf16>, vector<80x64xbf16>, vector<64x64xf32> -> vector<64x64xf32>
    %c0_55 = arith.constant 0 : index
    %c0_56 = arith.constant 0 : index
    %c0_57 = arith.constant 0 : index
    %143 = vector.load %arg15[%c0_55, %c0_56, %c0_57] : memref<1x64x64xf32, #tpu.memory_space<vmem>>, vector<1x64x64xf32>
    %144 = vector.shape_cast %143 : vector<1x64x64xf32> to vector<64x64xf32>
    %145 = vector.shape_cast %142 : vector<64x64xf32> to vector<1x64x64xf32>
    tpu.vector_store %arg15[%c0_55, %c0_56, %c0_57], %145 {strides = array<i32>} : memref<1x64x64xf32, #tpu.memory_space<vmem>>, vector<1x64x64xf32>,
    return
  }
  func.func @transform_0(%arg0: i32) -> (i32, i32, i32) {
    %c0_i32 = arith.constant 0 : i32
    %c0_i32_0 = arith.constant 0 : i32
    %c0_i32_1 = arith.constant 0 : i32
    return %arg0, %c0_i32, %c0_i32_0 : i32, i32, i32
  }
  func.func @transform_1(%arg0: i32) -> (i32, i32) {
    %c0_i32 = arith.constant 0 : i32
    %c0_i32_0 = arith.constant 0 : i32
    %c0_i32_1 = arith.constant 0 : i32
    return %c0_i32, %c0_i32_0 : i32, i32
  }
  func.func @transform_2(%arg0: i32) -> (i32, i32) {
    %c0_i32 = arith.constant 0 : i32
    %c0_i32_0 = arith.constant 0 : i32
    %c0_i32_1 = arith.constant 0 : i32
    return %c0_i32, %c0_i32_0 : i32, i32
  }
  func.func @transform_3(%arg0: i32) -> (i32, i32) {
    %c0_i32 = arith.constant 0 : i32
    %c0_i32_0 = arith.constant 0 : i32
    %c0_i32_1 = arith.constant 0 : i32
    return %c0_i32, %c0_i32_0 : i32, i32
  }
  func.func @transform_4(%arg0: i32) -> (i32, i32) {
    %c0_i32 = arith.constant 0 : i32
    %c0_i32_0 = arith.constant 0 : i32
    %c0_i32_1 = arith.constant 0 : i32
    return %c0_i32, %c0_i32_0 : i32, i32
  }
  func.func @transform_5(%arg0: i32) -> (i32, i32) {
    %c0_i32 = arith.constant 0 : i32
    %c0_i32_0 = arith.constant 0 : i32
    %c0_i32_1 = arith.constant 0 : i32
    return %c0_i32, %c0_i32_0 : i32, i32
  }
  func.func @transform_6(%arg0: i32) -> (i32, i32) {
    %c0_i32 = arith.constant 0 : i32
    %c0_i32_0 = arith.constant 0 : i32
    %c0_i32_1 = arith.constant 0 : i32
    return %c0_i32, %c0_i32_0 : i32, i32
  }
  func.func @transform_7(%arg0: i32) -> (i32, i32) {
    %c0_i32 = arith.constant 0 : i32
    %c0_i32_0 = arith.constant 0 : i32
    %c0_i32_1 = arith.constant 0 : i32
    return %c0_i32, %c0_i32_0 : i32, i32
  }
  func.func @transform_8(%arg0: i32) -> (i32, i32) {
    %c0_i32 = arith.constant 0 : i32
    %c0_i32_0 = arith.constant 0 : i32
    %c0_i32_1 = arith.constant 0 : i32
    return %c0_i32, %c0_i32_0 : i32, i32
  }
  func.func @transform_9(%arg0: i32) -> (i32, i32) {
    %c0_i32 = arith.constant 0 : i32
    %c0_i32_0 = arith.constant 0 : i32
    %c0_i32_1 = arith.constant 0 : i32
    return %c0_i32, %c0_i32_0 : i32, i32
  }
  func.func @transform_10(%arg0: i32) -> (i32, i32) {
    %c0_i32 = arith.constant 0 : i32
    %c0_i32_0 = arith.constant 0 : i32
    %c0_i32_1 = arith.constant 0 : i32
    return %c0_i32, %c0_i32_0 : i32, i32
  }
  func.func @transform_11(%arg0: i32) -> (i32, i32) {
    %c0_i32 = arith.constant 0 : i32
    %c0_i32_0 = arith.constant 0 : i32
    %c0_i32_1 = arith.constant 0 : i32
    return %c0_i32, %c0_i32_0 : i32, i32
  }
  func.func @transform_12(%arg0: i32) -> (i32, i32) {
    %c0_i32 = arith.constant 0 : i32
    %c0_i32_0 = arith.constant 0 : i32
    %c0_i32_1 = arith.constant 0 : i32
    return %c0_i32, %c0_i32_0 : i32, i32
  }
  func.func @transform_13(%arg0: i32) -> (i32, i32) {
    %c0_i32 = arith.constant 0 : i32
    %c0_i32_0 = arith.constant 0 : i32
    %c0_i32_1 = arith.constant 0 : i32
    return %c0_i32, %c0_i32_0 : i32, i32
  }
  func.func @transform_14(%arg0: i32) -> (i32, i32, i32) {
    %c0_i32 = arith.constant 0 : i32
    %c0_i32_0 = arith.constant 0 : i32
    %c0_i32_1 = arith.constant 0 : i32
    return %arg0, %c0_i32, %c0_i32_0 : i32, i32, i32
  }
}

</mosaic_0001>

<llo_original>
// kernel: tpu_custom_call.1
$region0: #{tpu_custom_call.1}
  #allocation0 [shape = 'u32[]', space=smem, size = 0x4, offset = 0x4, fixed_abs, tag = 'smem constant byte address 0x4 - core index']
  #allocation1 [shape = 'u32[144,128]{1,0:T(1,128)}', space=vmem, size = 0x12000, scoped, tag = 'internal scratch']
  %s0 = inlined_call_operand.vmem [shape: f32[2,1,96], index: 0, kind: input, shape index: {}]
  %s1 = inlined_call_operand.vmem [shape: f32[16,5], index: 1, kind: input, shape index: {}]
  %s2 = inlined_call_operand.vmem [shape: f32[16,2], index: 2, kind: input, shape index: {}]
  %s3 = inlined_call_operand.vmem [shape: bf16[16,80], index: 3, kind: input, shape index: {}]
  %s4 = inlined_call_operand.vmem [shape: f32[16,2], index: 4, kind: input, shape index: {}]
  %s5 = inlined_call_operand.vmem [shape: bf16[32,48], index: 5, kind: input, shape index: {}]
  %s6 = inlined_call_operand.vmem [shape: f32[32,2], index: 6, kind: input, shape index: {}]
  %s7 = inlined_call_operand.vmem [shape: bf16[32,96], index: 7, kind: input, shape index: {}]
  %s8 = inlined_call_operand.vmem [shape: f32[32,2], index: 8, kind: input, shape index: {}]
  %s9 = inlined_call_operand.vmem [shape: bf16[64,96], index: 9, kind: input, shape index: {}]
  %s10 = inlined_call_operand.vmem [shape: f32[64,2], index: 10, kind: input, shape index: {}]
  %s11 = inlined_call_operand.vmem [shape: bf16[64,192], index: 11, kind: input, shape index: {}]
  %s12 = inlined_call_operand.vmem [shape: f32[64,2], index: 12, kind: input, shape index: {}]
  %s13 = inlined_call_operand.vmem [shape: bf16[80,64], index: 13, kind: input, shape index: {}]
  %s14 = inlined_call_operand.hbm [shape: f32[2,64,64], index: 14, kind: output, shape index: {}]
  %s15 = sld [smem:[#allocation0]]
  $region89: #{tpu_custom_call.1} parent=0
    _
  %s17 = ssub.s32 1, %s15
  %s18 = scalar_select 0, %s17, %s15
  $region1: #{tpu_custom_call.1} parent=0
    #allocation2 [shape = 'u8[65536]{0}', space=vmem, size = 0x10000, scoped, tag = 'output window, operand 0']
    #allocation3 [shape = 's32[2]{0}', space=sflag, size = 0x8, scoped, tag = 'scoped memory for tpu_custom_call.1']
    %19 = vsyncpa [#allocation3], 0
    %s20 = scalar_lea.sflag [#allocation3], 1
    %21 = vsyncpa %s20, 0
    loop: start=0, step=1, limit=4
    $region2: #{tpu_custom_call.1} parent=1 // loop_pre_header
      _
    $region3: #{tpu_custom_call.1} parent=1 // loop_header
      %s23 = sphi 0, %s27
      %p24 = scmp.ge.s32.totalorder %s23, 4
      %s33 = sphi 0, %s35
      %s36 = sphi 0, %s33
      %s37 = sphi 0, %s36
      %s53 = sphi 0, %s37
      %s57 = sphi 0, %s57
      %s59 = sphi 0, %s57
      %s60 = sphi 0, %s59
      %s74 = sphi 0, %s60
      %s78 = sphi 0, %s78
      %s80 = sphi 0, %s78
      %s81 = sphi 0, %s80
      %s95 = sphi 0, %s81
      %s99 = sphi 0, %s99
      %s101 = sphi 0, %s99
      %s102 = sphi 0, %s101
      %s116 = sphi 0, %s102
      %s120 = sphi 0, %s120
      %s122 = sphi 0, %s120
      %s123 = sphi 0, %s122
      %s137 = sphi 0, %s123
      %s141 = sphi 0, %s141
      %s143 = sphi 0, %s141
      %s144 = sphi 0, %s143
      %s158 = sphi 0, %s144
      %s162 = sphi 0, %s162
      %s164 = sphi 0, %s162
      %s165 = sphi 0, %s164
      %s179 = sphi 0, %s165
      %s183 = sphi 0, %s183
      %s185 = sphi 0, %s183
      %s186 = sphi 0, %s185
      %s200 = sphi 0, %s186
      %s204 = sphi 0, %s204
      %s206 = sphi 0, %s204
      %s207 = sphi 0, %s206
      %s221 = sphi 0, %s207
      %s225 = sphi 0, %s225
      %s227 = sphi 0, %s225
      %s228 = sphi 0, %s227
      %s242 = sphi 0, %s228
      %s246 = sphi 0, %s246
      %s248 = sphi 0, %s246
      %s249 = sphi 0, %s248
      %s263 = sphi 0, %s249
      %s267 = sphi 0, %s267
      %s269 = sphi 0, %s267
      %s270 = sphi 0, %s269
      %s284 = sphi 0, %s270
      %s288 = sphi 0, %s288
      %s290 = sphi 0, %s288
      %s291 = sphi 0, %s290
      %s305 = sphi 0, %s291
      %s309 = sphi 0, %s309
      %s311 = sphi 0, %s309
      %s312 = sphi 0, %s311
      %s326 = sphi 0, %s312
      %s332 = sphi 0, %s334
      %s335 = sphi 0, %s332
      %s336 = sphi 0, %s335
      %s352 = sphi 0, %s336
    $region4: #{tpu_custom_call.1} parent=1 // loop_header_branch
      %26 = sbr.rel (%p24) target = $region8
    $region5: #{tpu_custom_call.1} parent=1 // loop_body
      %s28 = ssub.s32 %s23, 1
      %s29 = ssub.s32 %s23, 2
      %s30 = sadd.s32 %s23, 1
      %s31 = ssub.s32 %s23, %s30
      %p32 = scmp.eq.s32.totalorder %s31, 0
      %s34 = sadd.s32 %s33, 1
      %s35 = scalar_select %p32, %s33, %s34
      %p38 = pneg %p32
      %p39 = scmp.eq.s32.totalorder %s23, 1
      %p40 = por %p38, %p39
      %p41 = scmp.ne.s32.totalorder %s33, %s36
      %p42 = scmp.eq.s32.totalorder %s23, 0
      %p43 = por %p41, %p42
      %p44 = scmp.ne.s32.totalorder %s33, %s36
      %p45 = scmp.eq.s32.totalorder %s28, 1
      %p46 = por %p44, %p45
      %p47 = scmp.ne.s32.totalorder %s36, %s37
      %p48 = scmp.eq.s32.totalorder %s28, 0
      %p49 = por %p47, %p48
      %p50 = scmp.ne.s32.totalorder %s36, %s37
      %p51 = scmp.eq.s32.totalorder %s29, 1
      %p52 = por %p50, %p51
      %p54 = scmp.ne.s32.totalorder %s37, %s53
      %p55 = scmp.eq.s32.totalorder %s29, 0
      %p56 = por %p54, %p55
      %s58 = sadd.s32 %s57, 1
      %p61 = scmp.eq.s32.totalorder %s23, 1
      %p62 = scmp.ne.s32.totalorder %s57, %s59
      %p63 = scmp.eq.s32.totalorder %s23, 0
      %p64 = por %p62, %p63
      %p65 = scmp.ne.s32.totalorder %s57, %s59
      %p66 = scmp.eq.s32.totalorder %s28, 1
      %p67 = por %p65, %p66
      %p68 = scmp.ne.s32.totalorder %s59, %s60
      %p69 = scmp.eq.s32.totalorder %s28, 0
      %p70 = por %p68, %p69
      %p71 = scmp.ne.s32.totalorder %s59, %s60
      %p72 = scmp.eq.s32.totalorder %s29, 1
      %p73 = por %p71, %p72
      %p75 = scmp.ne.s32.totalorder %s60, %s74
      %p76 = scmp.eq.s32.totalorder %s29, 0
      %p77 = por %p75, %p76
      %s79 = sadd.s32 %s78, 1
      %p82 = scmp.eq.s32.totalorder %s23, 1
      %p83 = scmp.ne.s32.totalorder %s78, %s80
      %p84 = scmp.eq.s32.totalorder %s23, 0
      %p85 = por %p83, %p84
      %p86 = scmp.ne.s32.totalorder %s78, %s80
      %p87 = scmp.eq.s32.totalorder %s28, 1
      %p88 = por %p86, %p87
      %p89 = scmp.ne.s32.totalorder %s80, %s81
      %p90 = scmp.eq.s32.totalorder %s28, 0
      %p91 = por %p89, %p90
      %p92 = scmp.ne.s32.totalorder %s80, %s81
      %p93 = scmp.eq.s32.totalorder %s29, 1
      %p94 = por %p92, %p93
      %p96 = scmp.ne.s32.totalorder %s81, %s95
      %p97 = scmp.eq.s32.totalorder %s29, 0
      %p98 = por %p96, %p97
      %s100 = sadd.s32 %s99, 1
      %p103 = scmp.eq.s32.totalorder %s23, 1
      %p104 = scmp.ne.s32.totalorder %s99, %s101
      %p105 = scmp.eq.s32.totalorder %s23, 0
      %p106 = por %p104, %p105
      %p107 = scmp.ne.s32.totalorder %s99, %s101
      %p108 = scmp.eq.s32.totalorder %s28, 1
      %p109 = por %p107, %p108
      %p110 = scmp.ne.s32.totalorder %s101, %s102
      %p111 = scmp.eq.s32.totalorder %s28, 0
      %p112 = por %p110, %p111
      %p113 = scmp.ne.s32.totalorder %s101, %s102
      %p114 = scmp.eq.s32.totalorder %s29, 1
      %p115 = por %p113, %p114
      %p117 = scmp.ne.s32.totalorder %s102, %s116
      %p118 = scmp.eq.s32.totalorder %s29, 0
      %p119 = por %p117, %p118
      %s121 = sadd.s32 %s120, 1
      %p124 = scmp.eq.s32.totalorder %s23, 1
      %p125 = scmp.ne.s32.totalorder %s120, %s122
      %p126 = scmp.eq.s32.totalorder %s23, 0
      %p127 = por %p125, %p126
      %p128 = scmp.ne.s32.totalorder %s120, %s122
      %p129 = scmp.eq.s32.totalorder %s28, 1
      %p130 = por %p128, %p129
      %p131 = scmp.ne.s32.totalorder %s122, %s123
      %p132 = scmp.eq.s32.totalorder %s28, 0
      %p133 = por %p131, %p132
      %p134 = scmp.ne.s32.totalorder %s122, %s123
      %p135 = scmp.eq.s32.totalorder %s29, 1
      %p136 = por %p134, %p135
      %p138 = scmp.ne.s32.totalorder %s123, %s137
      %p139 = scmp.eq.s32.totalorder %s29, 0
      %p140 = por %p138, %p139
      %s142 = sadd.s32 %s141, 1
      %p145 = scmp.eq.s32.totalorder %s23, 1
      %p146 = scmp.ne.s32.totalorder %s141, %s143
      %p147 = scmp.eq.s32.totalorder %s23, 0
      %p148 = por %p146, %p147
      %p149 = scmp.ne.s32.totalorder %s141, %s143
      %p150 = scmp.eq.s32.totalorder %s28, 1
      %p151 = por %p149, %p150
      %p152 = scmp.ne.s32.totalorder %s143, %s144
      %p153 = scmp.eq.s32.totalorder %s28, 0
      %p154 = por %p152, %p153
      %p155 = scmp.ne.s32.totalorder %s143, %s144
      %p156 = scmp.eq.s32.totalorder %s29, 1
      %p157 = por %p155, %p156
      %p159 = scmp.ne.s32.totalorder %s144, %s158
      %p160 = scmp.eq.s32.totalorder %s29, 0
      %p161 = por %p159, %p160
      %s163 = sadd.s32 %s162, 1
      %p166 = scmp.eq.s32.totalorder %s23, 1
      %p167 = scmp.ne.s32.totalorder %s162, %s164
      %p168 = scmp.eq.s32.totalorder %s23, 0
      %p169 = por %p167, %p168
      %p170 = scmp.ne.s32.totalorder %s162, %s164
      %p171 = scmp.eq.s32.totalorder %s28, 1
      %p172 = por %p170, %p171
      %p173 = scmp.ne.s32.totalorder %s164, %s165
      %p174 = scmp.eq.s32.totalorder %s28, 0
      %p175 = por %p173, %p174
      %p176 = scmp.ne.s32.totalorder %s164, %s165
      %p177 = scmp.eq.s32.totalorder %s29, 1
      %p178 = por %p176, %p177
      %p180 = scmp.ne.s32.totalorder %s165, %s179
      %p181 = scmp.eq.s32.totalorder %s29, 0
      %p182 = por %p180, %p181
      %s184 = sadd.s32 %s183, 1
      %p187 = scmp.eq.s32.totalorder %s23, 1
      %p188 = scmp.ne.s32.totalorder %s183, %s185
      %p189 = scmp.eq.s32.totalorder %s23, 0
      %p190 = por %p188, %p189
      %p191 = scmp.ne.s32.totalorder %s183, %s185
      %p192 = scmp.eq.s32.totalorder %s28, 1
      %p193 = por %p191, %p192
      %p194 = scmp.ne.s32.totalorder %s185, %s186
      %p195 = scmp.eq.s32.totalorder %s28, 0
      %p196 = por %p194, %p195
      %p197 = scmp.ne.s32.totalorder %s185, %s186
      %p198 = scmp.eq.s32.totalorder %s29, 1
      %p199 = por %p197, %p198
      %p201 = scmp.ne.s32.totalorder %s186, %s200
      %p202 = scmp.eq.s32.totalorder %s29, 0
      %p203 = por %p201, %p202
      %s205 = sadd.s32 %s204, 1
      %p208 = scmp.eq.s32.totalorder %s23, 1
      %p209 = scmp.ne.s32.totalorder %s204, %s206
      %p210 = scmp.eq.s32.totalorder %s23, 0
      %p211 = por %p209, %p210
      %p212 = scmp.ne.s32.totalorder %s204, %s206
      %p213 = scmp.eq.s32.totalorder %s28, 1
      %p214 = por %p212, %p213
      %p215 = scmp.ne.s32.totalorder %s206, %s207
      %p216 = scmp.eq.s32.totalorder %s28, 0
      %p217 = por %p215, %p216
      %p218 = scmp.ne.s32.totalorder %s206, %s207
      %p219 = scmp.eq.s32.totalorder %s29, 1
      %p220 = por %p218, %p219
      %p222 = scmp.ne.s32.totalorder %s207, %s221
      %p223 = scmp.eq.s32.totalorder %s29, 0
      %p224 = por %p222, %p223
      %s226 = sadd.s32 %s225, 1
      %p229 = scmp.eq.s32.totalorder %s23, 1
      %p230 = scmp.ne.s32.totalorder %s225, %s227
      %p231 = scmp.eq.s32.totalorder %s23, 0
      %p232 = por %p230, %p231
      %p233 = scmp.ne.s32.totalorder %s225, %s227
      %p234 = scmp.eq.s32.totalorder %s28, 1
      %p235 = por %p233, %p234
      %p236 = scmp.ne.s32.totalorder %s227, %s228
      %p237 = scmp.eq.s32.totalorder %s28, 0
      %p238 = por %p236, %p237
      %p239 = scmp.ne.s32.totalorder %s227, %s228
      %p240 = scmp.eq.s32.totalorder %s29, 1
      %p241 = por %p239, %p240
      %p243 = scmp.ne.s32.totalorder %s228, %s242
      %p244 = scmp.eq.s32.totalorder %s29, 0
      %p245 = por %p243, %p244
      %s247 = sadd.s32 %s246, 1
      %p250 = scmp.eq.s32.totalorder %s23, 1
      %p251 = scmp.ne.s32.totalorder %s246, %s248
      %p252 = scmp.eq.s32.totalorder %s23, 0
      %p253 = por %p251, %p252
      %p254 = scmp.ne.s32.totalorder %s246, %s248
      %p255 = scmp.eq.s32.totalorder %s28, 1
      %p256 = por %p254, %p255
      %p257 = scmp.ne.s32.totalorder %s248, %s249
      %p258 = scmp.eq.s32.totalorder %s28, 0
      %p259 = por %p257, %p258
      %p260 = scmp.ne.s32.totalorder %s248, %s249
      %p261 = scmp.eq.s32.totalorder %s29, 1
      %p262 = por %p260, %p261
      %p264 = scmp.ne.s32.totalorder %s249, %s263
      %p265 = scmp.eq.s32.totalorder %s29, 0
      %p266 = por %p264, %p265
      %s268 = sadd.s32 %s267, 1
      %p271 = scmp.eq.s32.totalorder %s23, 1
      %p272 = scmp.ne.s32.totalorder %s267, %s269
      %p273 = scmp.eq.s32.totalorder %s23, 0
      %p274 = por %p272, %p273
      %p275 = scmp.ne.s32.totalorder %s267, %s269
      %p276 = scmp.eq.s32.totalorder %s28, 1
      %p277 = por %p275, %p276
      %p278 = scmp.ne.s32.totalorder %s269, %s270
      %p279 = scmp.eq.s32.totalorder %s28, 0
      %p280 = por %p278, %p279
      %p281 = scmp.ne.s32.totalorder %s269, %s270
      %p282 = scmp.eq.s32.totalorder %s29, 1
      %p283 = por %p281, %p282
      %p285 = scmp.ne.s32.totalorder %s270, %s284
      %p286 = scmp.eq.s32.totalorder %s29, 0
      %p287 = por %p285, %p286
      %s289 = sadd.s32 %s288, 1
      %p292 = scmp.eq.s32.totalorder %s23, 1
      %p293 = scmp.ne.s32.totalorder %s288, %s290
      %p294 = scmp.eq.s32.totalorder %s23, 0
      %p295 = por %p293, %p294
      %p296 = scmp.ne.s32.totalorder %s288, %s290
      %p297 = scmp.eq.s32.totalorder %s28, 1
      %p298 = por %p296, %p297
      %p299 = scmp.ne.s32.totalorder %s290, %s291
      %p300 = scmp.eq.s32.totalorder %s28, 0
      %p301 = por %p299, %p300
      %p302 = scmp.ne.s32.totalorder %s290, %s291
      %p303 = scmp.eq.s32.totalorder %s29, 1
      %p304 = por %p302, %p303
      %p306 = scmp.ne.s32.totalorder %s291, %s305
      %p307 = scmp.eq.s32.totalorder %s29, 0
      %p308 = por %p306, %p307
      %s310 = sadd.s32 %s309, 1
      %p313 = scmp.eq.s32.totalorder %s23, 1
      %p314 = scmp.ne.s32.totalorder %s309, %s311
      %p315 = scmp.eq.s32.totalorder %s23, 0
      %p316 = por %p314, %p315
      %p317 = scmp.ne.s32.totalorder %s309, %s311
      %p318 = scmp.eq.s32.totalorder %s28, 1
      %p319 = por %p317, %p318
      %p320 = scmp.ne.s32.totalorder %s311, %s312
      %p321 = scmp.eq.s32.totalorder %s28, 0
      %p322 = por %p320, %p321
      %p323 = scmp.ne.s32.totalorder %s311, %s312
      %p324 = scmp.eq.s32.totalorder %s29, 1
      %p325 = por %p323, %p324
      %p327 = scmp.ne.s32.totalorder %s312, %s326
      %p328 = scmp.eq.s32.totalorder %s29, 0
      %p329 = por %p327, %p328
      %s330 = ssub.s32 %s23, %s30
      %p331 = scmp.eq.s32.totalorder %s330, 0
      %s333 = sadd.s32 %s332, 1
      %s334 = scalar_select %p331, %s332, %s333
      %p337 = pneg %p331
      %p338 = scmp.eq.s32.totalorder %s23, 1
      %p339 = por %p337, %p338
      %p340 = scmp.ne.s32.totalorder %s332, %s335
      %p341 = scmp.eq.s32.totalorder %s23, 0
      %p342 = por %p340, %p341
      %p343 = scmp.ne.s32.totalorder %s332, %s335
      %p344 = scmp.eq.s32.totalorder %s28, 1
      %p345 = por %p343, %p344
      %p346 = scmp.ne.s32.totalorder %s335, %s336
      %p347 = scmp.eq.s32.totalorder %s28, 0
      %p348 = por %p346, %p347
      %p349 = scmp.ne.s32.totalorder %s335, %s336
      %p350 = scmp.eq.s32.totalorder %s29, 1
      %p351 = por %p349, %p350
      %p353 = scmp.ne.s32.totalorder %s336, %s352
      %p354 = scmp.eq.s32.totalorder %s29, 0
      %p355 = por %p353, %p354
      %p356 = scmp.le.s32.totalorder 1, %s23
      %p357 = scmp.lt.s32.totalorder %s23, 3
      %p358 = pnand %p356, %p357
      %p359 = pneg %p358
      // Predicated region
      $region9: #{tpu_custom_call.1} parent=5 // pred_check
        _
      $region10: #{tpu_custom_call.1} parent=5 // pred_check_branch
        %361 = sbr.rel (%p358) target = $region12
      $region11: #{tpu_custom_call.1} parent=5 // pred_region
        %s362 = ssub.s32 %s23, 1
        // Predicated region
        $region13: #{tpu_custom_call.1} parent=11 // pred_check
          %p363 = pneg %p70
        $region14: #{tpu_custom_call.1} parent=11 // pred_check_branch
          %365 = sbr.rel (%p363) target = $region16
        $region15: #{tpu_custom_call.1} parent=11 // pred_region
          _
        $region16: #{tpu_custom_call.1} parent=11 // pred_fallthru
          _
        // Predicated region
        $region17: #{tpu_custom_call.1} parent=11 // pred_check
          %p366 = pneg %p91
        $region18: #{tpu_custom_call.1} parent=11 // pred_check_branch
          %368 = sbr.rel (%p366) target = $region20
        $region19: #{tpu_custom_call.1} parent=11 // pred_region
          _
        $region20: #{tpu_custom_call.1} parent=11 // pred_fallthru
          _
        // Predicated region
        $region21: #{tpu_custom_call.1} parent=11 // pred_check
          %p369 = pneg %p112
        $region22: #{tpu_custom_call.1} parent=11 // pred_check_branch
          %371 = sbr.rel (%p369) target = $region24
        $region23: #{tpu_custom_call.1} parent=11 // pred_region
          _
        $region24: #{tpu_custom_call.1} parent=11 // pred_fallthru
          _
        // Predicated region
        $region25: #{tpu_custom_call.1} parent=11 // pred_check
          %p372 = pneg %p133
        $region26: #{tpu_custom_call.1} parent=11 // pred_check_branch
          %374 = sbr.rel (%p372) target = $region28
        $region27: #{tpu_custom_call.1} parent=11 // pred_region
          _
        $region28: #{tpu_custom_call.1} parent=11 // pred_fallthru
          _
        // Predicated region
        $region29: #{tpu_custom_call.1} parent=11 // pred_check
          %p375 = pneg %p154
        $region30: #{tpu_custom_call.1} parent=11 // pred_check_branch
          %377 = sbr.rel (%p375) target = $region32
        $region31: #{tpu_custom_call.1} parent=11 // pred_region
          _
        $region32: #{tpu_custom_call.1} parent=11 // pred_fallthru
          _
        // Predicated region
        $region33: #{tpu_custom_call.1} parent=11 // pred_check
          %p378 = pneg %p175
        $region34: #{tpu_custom_call.1} parent=11 // pred_check_branch
          %380 = sbr.rel (%p378) target = $region36
        $region35: #{tpu_custom_call.1} parent=11 // pred_region
          _
        $region36: #{tpu_custom_call.1} parent=11 // pred_fallthru
          _
        // Predicated region
        $region37: #{tpu_custom_call.1} parent=11 // pred_check
          %p381 = pneg %p196
        $region38: #{tpu_custom_call.1} parent=11 // pred_check_branch
          %383 = sbr.rel (%p381) target = $region40
        $region39: #{tpu_custom_call.1} parent=11 // pred_region
          _
        $region40: #{tpu_custom_call.1} parent=11 // pred_fallthru
          _
        // Predicated region
        $region41: #{tpu_custom_call.1} parent=11 // pred_check
          %p384 = pneg %p217
        $region42: #{tpu_custom_call.1} parent=11 // pred_check_branch
          %386 = sbr.rel (%p384) target = $region44
        $region43: #{tpu_custom_call.1} parent=11 // pred_region
          _
        $region44: #{tpu_custom_call.1} parent=11 // pred_fallthru
          _
        // Predicated region
        $region45: #{tpu_custom_call.1} parent=11 // pred_check
          %p387 = pneg %p238
        $region46: #{tpu_custom_call.1} parent=11 // pred_check_branch
          %389 = sbr.rel (%p387) target = $region48
        $region47: #{tpu_custom_call.1} parent=11 // pred_region
          _
        $region48: #{tpu_custom_call.1} parent=11 // pred_fallthru
          _
        // Predicated region
        $region49: #{tpu_custom_call.1} parent=11 // pred_check
          %p390 = pneg %p259
        $region50: #{tpu_custom_call.1} parent=11 // pred_check_branch
          %392 = sbr.rel (%p390) target = $region52
        $region51: #{tpu_custom_call.1} parent=11 // pred_region
          _
        $region52: #{tpu_custom_call.1} parent=11 // pred_fallthru
          _
        // Predicated region
        $region53: #{tpu_custom_call.1} parent=11 // pred_check
          %p393 = pneg %p280
        $region54: #{tpu_custom_call.1} parent=11 // pred_check_branch
          %395 = sbr.rel (%p393) target = $region56
        $region55: #{tpu_custom_call.1} parent=11 // pred_region
          _
        $region56: #{tpu_custom_call.1} parent=11 // pred_fallthru
          _
        // Predicated region
        $region57: #{tpu_custom_call.1} parent=11 // pred_check
          %p396 = pneg %p301
        $region58: #{tpu_custom_call.1} parent=11 // pred_check_branch
          %398 = sbr.rel (%p396) target = $region60
        $region59: #{tpu_custom_call.1} parent=11 // pred_region
          _
        $region60: #{tpu_custom_call.1} parent=11 // pred_fallthru
          _
        // Predicated region
        $region61: #{tpu_custom_call.1} parent=11 // pred_check
          %p399 = pneg %p322
        $region62: #{tpu_custom_call.1} parent=11 // pred_check_branch
          %401 = sbr.rel (%p399) target = $region64
        $region63: #{tpu_custom_call.1} parent=11 // pred_region
          _
        $region64: #{tpu_custom_call.1} parent=11 // pred_fallthru
          _
      $region12: #{tpu_custom_call.1} parent=5 // pred_fallthru
        _
      %p402 = scmp.lt.s32.totalorder %s23, 2
      // Predicated region
      $region65: #{tpu_custom_call.1} parent=5 // pred_check
        %p403 = pneg %p402
      $region66: #{tpu_custom_call.1} parent=5 // pred_check_branch
        %405 = sbr.rel (%p403) target = $region68
      $region67: #{tpu_custom_call.1} parent=5 // pred_region
        // Predicated region
        $region69: #{tpu_custom_call.1} parent=67 // pred_check
          %p406 = pneg %p43
        $region70: #{tpu_custom_call.1} parent=67 // pred_check_branch
          %408 = sbr.rel (%p406) target = $region72
        $region71: #{tpu_custom_call.1} parent=67 // pred_region
          %p409 = scmp.lt.s32.totalorder %s23, 1
          %s410 = scalar_select %p409, %s23, 1
          %s411 = scalar_lea.vmem %s0, %s410
        $region72: #{tpu_custom_call.1} parent=67 // pred_fallthru
          _
      $region68: #{tpu_custom_call.1} parent=5 // pred_fallthru
        _
      %p412 = scmp.le.s32.totalorder 1, %s23
      %p413 = scmp.lt.s32.totalorder %s23, 3
      %p414 = pnand %p412, %p413
      %p415 = pneg %p414
      // Predicated region
      $region73: #{tpu_custom_call.1} parent=5 // pred_check
        _
      $region74: #{tpu_custom_call.1} parent=5 // pred_check_branch
        %417 = sbr.rel (%p414) target = $region76
      $region75: #{tpu_custom_call.1} parent=5 // pred_region
        %s418 = ssub.s32 %s23, 1
        %p419 = scmp.lt.s32.totalorder %s28, 1
        %s420 = scalar_select %p419, %s28, 1
        %s421 = scalar_lea.vmem %s0, %s420
        %p422 = pneg %p49
        %p423 = pneg %p46
        %p424 = pneg %p70
        %p425 = pneg %p67
        %p426 = pneg %p91
        %p427 = pneg %p88
        %p428 = pneg %p112
        %p429 = pneg %p109
        %p430 = pneg %p133
        %p431 = pneg %p130
        %p432 = pneg %p154
        %p433 = pneg %p151
        %p434 = pneg %p175
        %p435 = pneg %p172
        %p436 = pneg %p196
        %p437 = pneg %p193
        %p438 = pneg %p217
        %p439 = pneg %p214
        %p440 = pneg %p238
        %p441 = pneg %p235
        %p442 = pneg %p259
        %p443 = pneg %p256
        %p444 = pneg %p280
        %p445 = pneg %p277
        %p446 = pneg %p301
        %p447 = pneg %p298
        %p448 = pneg %p322
        %p449 = pneg %p319
        %p450 = pneg %p348
        %p451 = pneg %p345
        %s452 = sand.u32 %s335, 1
        %s453 = scalar_lea.sflag [#allocation3], %s452
        %s454 = sand.u32 %s335, 1
        %s455 = smul.addr %s454, 64
        %s456 = scalar_lea.vmem [#allocation2], %s455
        %p457 = scmp.lt.s32.totalorder %s28, 1
        %s458 = scalar_select %p457, %s28, 1
        %s459 = scalar_lea.vmem %s0, %s458
        %v461 = vld [vmem:[%s459] sm:$0x1]
        %v462 = vld [vmem:[%s1] sm:$0xff]
        %v463 = vld [vmem:[%s1 + $0x8] sm:$0xff]
        %465 = vset.pattern.permute.xlu0 0
        %466 = vperm.xlu0 %465, %v462
        %v467 = vpop.permute.xlu0 %466
        %470 = vset.pattern.permute.xlu0 0
        %471 = vperm.xlu0 %470, %v463
        %v472 = vpop.permute.xlu0 %471
        %v475 = vlaneseq
        %v476 = vshrl.u32 %v475, 7
        %v477 = vsub.s32 0, %v476
        %v478 = vrot.slane %v461, %v477
        %v480 = vmul.f32 %v467, %v478
        %v481 = vmul.f32 %v472, %v478
        %482 = vset.pattern.permute.xlu0 1
        %483 = vperm.xlu0 %482, %v462
        %v484 = vpop.permute.xlu0 %483
        %486 = vset.pattern.permute.xlu0 1
        %487 = vperm.xlu0 %486, %v463
        %v488 = vpop.permute.xlu0 %487
        %v490 = vmul.f32 %v484, %v478
        %v491 = vmul.f32 %v488, %v478
        %494 = vrot.lane.b32.xlu0 %v490, 127
        %v495 = vpop.permute.xlu0 %494
        %496 = vrot.lane.b32.xlu0 %v491, 127
        %v497 = vpop.permute.xlu0 %496
        %v500 = vadd.f32 %v480, %v495
        %v501 = vadd.f32 %v481, %v497
        %502 = vset.pattern.permute.xlu0 2
        %503 = vperm.xlu0 %502, %v462
        %v504 = vpop.permute.xlu0 %503
        %506 = vset.pattern.permute.xlu0 2
        %507 = vperm.xlu0 %506, %v463
        %v508 = vpop.permute.xlu0 %507
        %v510 = vmul.f32 %v504, %v478
        %v511 = vmul.f32 %v508, %v478
        %514 = vrot.lane.b32.xlu0 %v510, 126
        %v515 = vpop.permute.xlu0 %514
        %516 = vrot.lane.b32.xlu0 %v511, 126
        %v517 = vpop.permute.xlu0 %516
        %v520 = vadd.f32 %v500, %v515
        %v521 = vadd.f32 %v501, %v517
        %522 = vset.pattern.permute.xlu0 3
        %523 = vperm.xlu0 %522, %v462
        %v524 = vpop.permute.xlu0 %523
        %526 = vset.pattern.permute.xlu0 3
        %527 = vperm.xlu0 %526, %v463
        %v528 = vpop.permute.xlu0 %527
        %v530 = vmul.f32 %v524, %v478
        %v531 = vmul.f32 %v528, %v478
        %534 = vrot.lane.b32.xlu0 %v530, 125
        %v535 = vpop.permute.xlu0 %534
        %536 = vrot.lane.b32.xlu0 %v531, 125
        %v537 = vpop.permute.xlu0 %536
        %v540 = vadd.f32 %v520, %v535
        %v541 = vadd.f32 %v521, %v537
        %542 = vset.pattern.permute.xlu0 4
        %543 = vperm.xlu0 %542, %v462
        %v544 = vpop.permute.xlu0 %543
        %546 = vset.pattern.permute.xlu0 4
        %547 = vperm.xlu0 %546, %v463
        %v548 = vpop.permute.xlu0 %547
        %v550 = vmul.f32 %v544, %v478
        %v551 = vmul.f32 %v548, %v478
        %554 = vrot.lane.b32.xlu0 %v550, 124
        %v555 = vpop.permute.xlu0 %554
        %556 = vrot.lane.b32.xlu0 %v551, 124
        %v557 = vpop.permute.xlu0 %556
        %v560 = vadd.f32 %v540, %v555
        %v561 = vadd.f32 %v541, %v557
        %v562 = vld [vmem:[%s2] sm:$0xff]
        %v563 = vld [vmem:[%s2 + $0x8] sm:$0xff]
        %565 = vset.pattern.permute.xlu0 0
        %566 = vperm.xlu0 %565, %v562
        %v567 = vpop.permute.xlu0 %566
        %570 = vset.pattern.permute.xlu0 0
        %571 = vperm.xlu0 %570, %v563
        %v572 = vpop.permute.xlu0 %571
        %v574 = vmul.f32 %v560, %v567
        %v575 = vmul.f32 %v561, %v572
        %576 = vset.pattern.permute.xlu0 1
        %577 = vperm.xlu0 %576, %v562
        %v578 = vpop.permute.xlu0 %577
        %580 = vset.pattern.permute.xlu0 1
        %581 = vperm.xlu0 %580, %v563
        %v582 = vpop.permute.xlu0 %581
        %v584 = vadd.f32 %v574, %v578
        %v585 = vadd.f32 %v575, %v582
        %v586 = vxor.u32 %v584, 2147483648
        %v587 = vxor.u32 %v585, 2147483648
        %v588 = vmul.f32 %v586, 1.442695
        %v589 = vpow.pop %v588
        %v590 = vmul.f32 %v587, 1.442695
        %v591 = vpow.pop %v590
        %v592 = vadd.f32 %v589, 1.0
        %v593 = vadd.f32 %v591, 1.0
        %v594 = vrcp.pop %v592
        %v595 = vmul.f32 1.0, %v594
        %v596 = vrcp.pop %v593
        %v597 = vmul.f32 1.0, %v596
        %v598 = vmul.f32 %v584, %v595
        %v599 = vmul.f32 %v585, %v597
        %v600 = vpack.c.bf16 %v599, %v598
        %602 = vrot.lane.b32.xlu0 %v600, 127
        %v603 = vpop.permute.xlu0 %602
        %605 = vrot.lane.b32.xlu0 %v600, 126
        %v606 = vpop.permute.xlu0 %605
        %608 = vrot.lane.b32.xlu0 %v600, 125
        %v609 = vpop.permute.xlu0 %608
        %611 = vrot.lane.b32.xlu0 %v600, 124
        %v612 = vpop.permute.xlu0 %611
        %v614 = vld [vmem:[%s3] sm:$0xf]
        %v615 = vld [vmem:[%s3 + $0x4] sm:$0xf]
        %v618 = vunpack.c.l.b16 %v614
        %v619 = vunpack.c.l.b16 %v615
        %v620 = vpack.c.b16 %v619, %v618
        %vm621 = vcmask 654336
        %v623 = vsel %vm621, %v620, 0
        %625 = vmatprep.subr.bf16.mxu0 0
        %626 = vmatpush1.bf16.msra.mxu0 %v600
        %627 = vmatprep.subr.bf16.mxu0 0
        %628 = vmatpush1.bf16.msra.mxu0 %v603
        %629 = vmatprep.subr.bf16.mxu0 0
        %630 = vmatpush1.bf16.msra.mxu0 %v606
        %631 = vmatprep.subr.bf16.mxu0 0
        %632 = vmatpush1.bf16.msra.mxu0 %v609
        %633 = vmatprep.subr.bf16.mxu0 0
        %634 = vmatpush1.bf16.msra.mxu0 %v612
        %635 = vmatprep.subr.bf16.mxu0 0
        %636 = vmatpush1.bf16.msra.mxu0 0
        %637 = vmatprep.subr.bf16.mxu0 0
        %638 = vmatpush1.bf16.msra.mxu0 0
        %639 = vmatprep.subr.bf16.mxu0 0
        %640 = vmatpush1.bf16.msra.mxu0 0
        %641 = vmatprep.subr.bf16.mxu0 0
        %642 = vmatpush1.bf16.msra.mxu0 0
        %643 = vmatprep.subr.bf16.mxu0 0
        %644 = vmatpush1.bf16.msra.mxu0 0
        %645 = vmatprep.subr.bf16.mxu0 0
        %646 = vmatpush1.bf16.msra.mxu0 0
        %647 = vmatprep.subr.bf16.mxu0 0
        %648 = vmatpush1.bf16.msra.mxu0 0
        %649 = vmatprep.subr.bf16.mxu0 0
        %650 = vmatpush1.bf16.msra.mxu0 0
        %651 = vmatprep.subr.bf16.mxu0 0
        %652 = vmatpush1.bf16.msra.mxu0 0
        %653 = vmatprep.subr.bf16.mxu0 0
        %654 = vmatpush1.bf16.msra.mxu0 0
        %655 = vmatprep.subr.bf16.mxu0 0
        %656 = vmatpush1.bf16.msra.mxu0 0
        %657 = vmatprep.mubr.bf16.mxu0 0
        %658 = vmatmul.mubr.bf16.gmra.mrb[0].mxu0 %v623
        %v659 = vpop.f32.mrb[0].mxu0
        %v660 = vadd.f32 0.0, %v659
        %v661 = vpop.f32.mrb[0].mxu0
        %v662 = vpop.f32.mrb[0].mxu0
        %v663 = vadd.f32 0.0, %v662
        %v664 = vpop.f32.mrb[0].mxu0
        %665 = vdwg.mxu0
        %v666 = vld [vmem:[%s4] sm:$0xff]
        %v667 = vld [vmem:[%s4 + $0x8] sm:$0xff]
        %669 = vset.pattern.permute.xlu0 0
        %670 = vperm.xlu0 %669, %v666
        %v671 = vpop.permute.xlu0 %670
        %674 = vset.pattern.permute.xlu0 0
        %675 = vperm.xlu0 %674, %v667
        %v676 = vpop.permute.xlu0 %675
        %v678 = vmul.f32 %v660, %v671
        %v679 = vmul.f32 %v663, %v676
        %680 = vset.pattern.permute.xlu0 1
        %681 = vperm.xlu0 %680, %v666
        %v682 = vpop.permute.xlu0 %681
        %684 = vset.pattern.permute.xlu0 1
        %685 = vperm.xlu0 %684, %v667
        %v686 = vpop.permute.xlu0 %685
        %v688 = vadd.f32 %v678, %v682
        %v689 = vadd.f32 %v679, %v686
        %v690 = vxor.u32 %v688, 2147483648
        %v691 = vxor.u32 %v689, 2147483648
        %v692 = vmul.f32 %v690, 1.442695
        %v693 = vpow.pop %v692
        %v694 = vmul.f32 %v691, 1.442695
        %v695 = vpow.pop %v694
        %v696 = vadd.f32 %v693, 1.0
        %v697 = vadd.f32 %v695, 1.0
        %v698 = vrcp.pop %v696
        %v699 = vmul.f32 1.0, %v698
        %v700 = vrcp.pop %v697
        %v701 = vmul.f32 1.0, %v700
        %v702 = vmul.f32 %v688, %v699
        %v703 = vmul.f32 %v689, %v701
        %v704 = vpack.c.bf16 %v703, %v702
        %706 = vrot.lane.b32.xlu0 %v704, 127
        %v707 = vpop.permute.xlu0 %706
        %709 = vrot.lane.b32.xlu0 %v704, 126
        %v710 = vpop.permute.xlu0 %709
        %v712 = vld [vmem:[%s5] sm:$0xf]
        %v713 = vld [vmem:[%s5 + $0x4] sm:$0xf]
        %v714 = vld [vmem:[%s5 + $0x8] sm:$0xf]
        %v715 = vld [vmem:[%s5 + $0xc] sm:$0xf]
        %v720 = vunpack.c.l.b16 %v712
        %v721 = vunpack.c.l.b16 %v713
        %v722 = vunpack.c.l.b16 %v714
        %v723 = vunpack.c.l.b16 %v715
        %v724 = vpack.c.b16 %v721, %v720
        %v725 = vpack.c.b16 %v723, %v722
        %vm726 = vcmask 392192
        %v728 = vsel %vm726, %v724, 0
        %v731 = vsel %vm726, %v725, 0
        %733 = vmatprep.subr.bf16.mxu0 0
        %734 = vmatpush1.bf16.msra.mxu0 %v704
        %735 = vmatprep.subr.bf16.mxu0 0
        %736 = vmatpush1.bf16.msra.mxu0 %v707
        %737 = vmatprep.subr.bf16.mxu0 0
        %738 = vmatpush1.bf16.msra.mxu0 %v710
        %739 = vmatprep.subr.bf16.mxu0 0
        %740 = vmatpush1.bf16.msra.mxu0 0
        %741 = vmatprep.subr.bf16.mxu0 0
        %742 = vmatpush1.bf16.msra.mxu0 0
        %743 = vmatprep.subr.bf16.mxu0 0
        %744 = vmatpush1.bf16.msra.mxu0 0
        %745 = vmatprep.subr.bf16.mxu0 0
        %746 = vmatpush1.bf16.msra.mxu0 0
        %747 = vmatprep.subr.bf16.mxu0 0
        %748 = vmatpush1.bf16.msra.mxu0 0
        %749 = vmatprep.subr.bf16.mxu0 0
        %750 = vmatpush1.bf16.msra.mxu0 0
        %751 = vmatprep.subr.bf16.mxu0 0
        %752 = vmatpush1.bf16.msra.mxu0 0
        %753 = vmatprep.subr.bf16.mxu0 0
        %754 = vmatpush1.bf16.msra.mxu0 0
        %755 = vmatprep.subr.bf16.mxu0 0
        %756 = vmatpush1.bf16.msra.mxu0 0
        %757 = vmatprep.subr.bf16.mxu0 0
        %758 = vmatpush1.bf16.msra.mxu0 0
        %759 = vmatprep.subr.bf16.mxu0 0
        %760 = vmatpush1.bf16.msra.mxu0 0
        %761 = vmatprep.subr.bf16.mxu0 0
        %762 = vmatpush1.bf16.msra.mxu0 0
        %763 = vmatprep.subr.bf16.mxu0 0
        %764 = vmatpush1.bf16.msra.mxu0 0
        %765 = vmatprep.mubr.bf16.mxu0 0
        %766 = vmatmul.mubr.bf16.gmra.mrb[0].mxu0 %v728
        %v767 = vpop.f32.mrb[0].mxu0
        %v768 = vadd.f32 0.0, %v767
        %v769 = vpop.f32.mrb[0].mxu0
        %v770 = vpop.f32.mrb[0].mxu0
        %v771 = vadd.f32 0.0, %v770
        %v772 = vpop.f32.mrb[0].mxu0
        %773 = vmatprep.mubr.bf16.mxu0 0
        %774 = vmatmul.mubr.bf16.gmra.mrb[0].mxu0 %v731
        %v775 = vpop.f32.mrb[0].mxu0
        %v776 = vadd.f32 0.0, %v775
        %v777 = vpop.f32.mrb[0].mxu0
        %v778 = vpop.f32.mrb[0].mxu0
        %v779 = vadd.f32 0.0, %v778
        %v780 = vpop.f32.mrb[0].mxu0
        %781 = vdwg.mxu0
        %v782 = vld [vmem:[%s6] sm:$0xff]
        %v783 = vld [vmem:[%s6 + $0x8] sm:$0xff]
        %v784 = vld [vmem:[%s6 + $0x10] sm:$0xff]
        %v785 = vld [vmem:[%s6 + $0x18] sm:$0xff]
        %787 = vset.pattern.permute.xlu0 0
        %788 = vperm.xlu0 %787, %v782
        %v789 = vpop.permute.xlu0 %788
        %792 = vset.pattern.permute.xlu0 0
        %793 = vperm.xlu0 %792, %v783
        %v794 = vpop.permute.xlu0 %793
        %797 = vset.pattern.permute.xlu0 0
        %798 = vperm.xlu0 %797, %v784
        %v799 = vpop.permute.xlu0 %798
        %802 = vset.pattern.permute.xlu0 0
        %803 = vperm.xlu0 %802, %v785
        %v804 = vpop.permute.xlu0 %803
        %v806 = vmul.f32 %v768, %v789
        %v807 = vmul.f32 %v771, %v794
        %v808 = vmul.f32 %v776, %v799
        %v809 = vmul.f32 %v779, %v804
        %810 = vset.pattern.permute.xlu0 1
        %811 = vperm.xlu0 %810, %v782
        %v812 = vpop.permute.xlu0 %811
        %814 = vset.pattern.permute.xlu0 1
        %815 = vperm.xlu0 %814, %v783
        %v816 = vpop.permute.xlu0 %815
        %818 = vset.pattern.permute.xlu0 1
        %819 = vperm.xlu0 %818, %v784
        %v820 = vpop.permute.xlu0 %819
        %822 = vset.pattern.permute.xlu0 1
        %823 = vperm.xlu0 %822, %v785
        %v824 = vpop.permute.xlu0 %823
        %v826 = vadd.f32 %v806, %v812
        %v827 = vadd.f32 %v807, %v816
        %v828 = vadd.f32 %v808, %v820
        %v829 = vadd.f32 %v809, %v824
        %v830 = vxor.u32 %v826, 2147483648
        %v831 = vxor.u32 %v827, 2147483648
        %v832 = vxor.u32 %v828, 2147483648
        %v833 = vxor.u32 %v829, 2147483648
        %v834 = vmul.f32 %v830, 1.442695
        %v835 = vpow.pop %v834
        %v836 = vmul.f32 %v831, 1.442695
        %v837 = vpow.pop %v836
        %v838 = vmul.f32 %v832, 1.442695
        %v839 = vpow.pop %v838
        %v840 = vmul.f32 %v833, 1.442695
        %v841 = vpow.pop %v840
        %v842 = vadd.f32 %v835, 1.0
        %v843 = vadd.f32 %v837, 1.0
        %v844 = vadd.f32 %v839, 1.0
        %v845 = vadd.f32 %v841, 1.0
        %v846 = vrcp.pop %v842
        %v847 = vmul.f32 1.0, %v846
        %v848 = vrcp.pop %v843
        %v849 = vmul.f32 1.0, %v848
        %v850 = vrcp.pop %v844
        %v851 = vmul.f32 1.0, %v850
        %v852 = vrcp.pop %v845
        %v853 = vmul.f32 1.0, %v852
        %v854 = vmul.f32 %v826, %v847
        %v855 = vmul.f32 %v827, %v849
        %v856 = vmul.f32 %v828, %v851
        %v857 = vmul.f32 %v829, %v853
        %v858 = vpack.c.bf16 %v855, %v854
        %v859 = vpack.c.bf16 %v857, %v856
        %862 = vrot.lane.b32.xlu0 %v858, 127
        %v863 = vpop.permute.xlu0 %862
        %864 = vrot.lane.b32.xlu0 %v859, 127
        %v865 = vpop.permute.xlu0 %864
        %868 = vrot.lane.b32.xlu0 %v858, 126
        %v869 = vpop.permute.xlu0 %868
        %870 = vrot.lane.b32.xlu0 %v859, 126
        %v871 = vpop.permute.xlu0 %870
        %v874 = vld [vmem:[%s7] sm:$0xf]
        %v875 = vld [vmem:[%s7 + $0x4] sm:$0xf]
        %v876 = vld [vmem:[%s7 + $0x8] sm:$0xf]
        %v877 = vld [vmem:[%s7 + $0xc] sm:$0xf]
        %v882 = vunpack.c.l.b16 %v874
        %v883 = vunpack.c.l.b16 %v875
        %v884 = vunpack.c.l.b16 %v876
        %v885 = vunpack.c.l.b16 %v877
        %v886 = vpack.c.b16 %v883, %v882
        %v887 = vpack.c.b16 %v885, %v884
        %vm888 = vcmask 785408
        %v890 = vsel %vm888, %v886, 0
        %v893 = vsel %vm888, %v887, 0
        %895 = vmatprep.subr.bf16.mxu0 0
        %896 = vmatpush1.bf16.msra.mxu0 %v858
        %897 = vmatprep.subr.bf16.mxu0 0
        %898 = vmatpush1.bf16.msra.mxu0 %v859
        %899 = vmatprep.subr.bf16.mxu0 0
        %900 = vmatpush1.bf16.msra.mxu0 %v863
        %901 = vmatprep.subr.bf16.mxu0 0
        %902 = vmatpush1.bf16.msra.mxu0 %v865
        %903 = vmatprep.subr.bf16.mxu0 0
        %904 = vmatpush1.bf16.msra.mxu0 %v869
        %905 = vmatprep.subr.bf16.mxu0 0
        %906 = vmatpush1.bf16.msra.mxu0 %v871
        %907 = vmatprep.subr.bf16.mxu0 0
        %908 = vmatpush1.bf16.msra.mxu0 0
        %909 = vmatprep.subr.bf16.mxu0 0
        %910 = vmatpush1.bf16.msra.mxu0 0
        %911 = vmatprep.subr.bf16.mxu0 0
        %912 = vmatpush1.bf16.msra.mxu0 0
        %913 = vmatprep.subr.bf16.mxu0 0
        %914 = vmatpush1.bf16.msra.mxu0 0
        %915 = vmatprep.subr.bf16.mxu0 0
        %916 = vmatpush1.bf16.msra.mxu0 0
        %917 = vmatprep.subr.bf16.mxu0 0
        %918 = vmatpush1.bf16.msra.mxu0 0
        %919 = vmatprep.subr.bf16.mxu0 0
        %920 = vmatpush1.bf16.msra.mxu0 0
        %921 = vmatprep.subr.bf16.mxu0 0
        %922 = vmatpush1.bf16.msra.mxu0 0
        %923 = vmatprep.subr.bf16.mxu0 0
        %924 = vmatpush1.bf16.msra.mxu0 0
        %925 = vmatprep.subr.bf16.mxu0 0
        %926 = vmatpush1.bf16.msra.mxu0 0
        %927 = vmatprep.mubr.bf16.mxu0 0
        %928 = vmatmul.mubr.bf16.gmra.mrb[0].mxu0 %v890
        %v929 = vpop.f32.mrb[0].mxu0
        %v930 = vadd.f32 0.0, %v929
        %v931 = vpop.f32.mrb[0].mxu0
        %v932 = vpop.f32.mrb[0].mxu0
        %v933 = vadd.f32 0.0, %v932
        %v934 = vpop.f32.mrb[0].mxu0
        %935 = vmatprep.mubr.bf16.mxu0 0
        %936 = vmatmul.mubr.bf16.gmra.mrb[0].mxu0 %v893
        %v937 = vpop.f32.mrb[0].mxu0
        %v938 = vadd.f32 0.0, %v937
        %v939 = vpop.f32.mrb[0].mxu0
        %v940 = vpop.f32.mrb[0].mxu0
        %v941 = vadd.f32 0.0, %v940
        %v942 = vpop.f32.mrb[0].mxu0
        %943 = vdwg.mxu0
        %v944 = vld [vmem:[%s8] sm:$0xff]
        %v945 = vld [vmem:[%s8 + $0x8] sm:$0xff]
        %v946 = vld [vmem:[%s8 + $0x10] sm:$0xff]
        %v947 = vld [vmem:[%s8 + $0x18] sm:$0xff]
        %949 = vset.pattern.permute.xlu0 0
        %950 = vperm.xlu0 %949, %v944
        %v951 = vpop.permute.xlu0 %950
        %954 = vset.pattern.permute.xlu0 0
        %955 = vperm.xlu0 %954, %v945
        %v956 = vpop.permute.xlu0 %955
        %959 = vset.pattern.permute.xlu0 0
        %960 = vperm.xlu0 %959, %v946
        %v961 = vpop.permute.xlu0 %960
        %964 = vset.pattern.permute.xlu0 0
        %965 = vperm.xlu0 %964, %v947
        %v966 = vpop.permute.xlu0 %965
        %v968 = vmul.f32 %v930, %v951
        %v969 = vmul.f32 %v933, %v956
        %v970 = vmul.f32 %v938, %v961
        %v971 = vmul.f32 %v941, %v966
        %972 = vset.pattern.permute.xlu0 1
        %973 = vperm.xlu0 %972, %v944
        %v974 = vpop.permute.xlu0 %973
        %976 = vset.pattern.permute.xlu0 1
        %977 = vperm.xlu0 %976, %v945
        %v978 = vpop.permute.xlu0 %977
        %980 = vset.pattern.permute.xlu0 1
        %981 = vperm.xlu0 %980, %v946
        %v982 = vpop.permute.xlu0 %981
        %984 = vset.pattern.permute.xlu0 1
        %985 = vperm.xlu0 %984, %v947
        %v986 = vpop.permute.xlu0 %985
        %v988 = vadd.f32 %v968, %v974
        %v989 = vadd.f32 %v969, %v978
        %v990 = vadd.f32 %v970, %v982
        %v991 = vadd.f32 %v971, %v986
        %v992 = vxor.u32 %v988, 2147483648
        %v993 = vxor.u32 %v989, 2147483648
        %v994 = vxor.u32 %v990, 2147483648
        %v995 = vxor.u32 %v991, 2147483648
        %v996 = vmul.f32 %v992, 1.442695
        %v997 = vpow.pop %v996
        %v998 = vmul.f32 %v993, 1.442695
        %v999 = vpow.pop %v998
        %v1000 = vmul.f32 %v994, 1.442695
        %v1001 = vpow.pop %v1000
        %v1002 = vmul.f32 %v995, 1.442695
        %v1003 = vpow.pop %v1002
        %v1004 = vadd.f32 %v997, 1.0
        %v1005 = vadd.f32 %v999, 1.0
        %v1006 = vadd.f32 %v1001, 1.0
        %v1007 = vadd.f32 %v1003, 1.0
        %v1008 = vrcp.pop %v1004
        %v1009 = vmul.f32 1.0, %v1008
        %v1010 = vrcp.pop %v1005
        %v1011 = vmul.f32 1.0, %v1010
        %v1012 = vrcp.pop %v1006
        %v1013 = vmul.f32 1.0, %v1012
        %v1014 = vrcp.pop %v1007
        %v1015 = vmul.f32 1.0, %v1014
        %v1016 = vmul.f32 %v988, %v1009
        %v1017 = vmul.f32 %v989, %v1011
        %v1018 = vmul.f32 %v990, %v1013
        %v1019 = vmul.f32 %v991, %v1015
        %v1020 = vpack.c.bf16 %v1017, %v1016
        %v1021 = vpack.c.bf16 %v1019, %v1018
        %1024 = vrot.lane.b32.xlu0 %v1020, 127
        %v1025 = vpop.permute.xlu0 %1024
        %1026 = vrot.lane.b32.xlu0 %v1021, 127
        %v1027 = vpop.permute.xlu0 %1026
        %1030 = vrot.lane.b32.xlu0 %v1020, 126
        %v1031 = vpop.permute.xlu0 %1030
        %1032 = vrot.lane.b32.xlu0 %v1021, 126
        %v1033 = vpop.permute.xlu0 %1032
        %v1036 = vld [vmem:[%s9] sm:$0xf]
        %v1037 = vld [vmem:[%s9 + $0x4] sm:$0xf]
        %v1038 = vld [vmem:[%s9 + $0x8] sm:$0xf]
        %v1039 = vld [vmem:[%s9 + $0xc] sm:$0xf]
        %v1040 = vld [vmem:[%s9 + $0x10] sm:$0xf]
        %v1041 = vld [vmem:[%s9 + $0x14] sm:$0xf]
        %v1042 = vld [vmem:[%s9 + $0x18] sm:$0xf]
        %v1043 = vld [vmem:[%s9 + $0x1c] sm:$0xf]
        %v1052 = vunpack.c.l.b16 %v1036
        %v1053 = vunpack.c.l.b16 %v1037
        %v1054 = vunpack.c.l.b16 %v1038
        %v1055 = vunpack.c.l.b16 %v1039
        %v1056 = vunpack.c.l.b16 %v1040
        %v1057 = vunpack.c.l.b16 %v1041
        %v1058 = vunpack.c.l.b16 %v1042
        %v1059 = vunpack.c.l.b16 %v1043
        %v1060 = vpack.c.b16 %v1053, %v1052
        %v1061 = vpack.c.b16 %v1055, %v1054
        %v1062 = vpack.c.b16 %v1057, %v1056
        %v1063 = vpack.c.b16 %v1059, %v1058
        %v1065 = vsel %vm888, %v1060, 0
        %v1068 = vsel %vm888, %v1061, 0
        %v1071 = vsel %vm888, %v1062, 0
        %v1074 = vsel %vm888, %v1063, 0
        %1076 = vmatprep.subr.bf16.mxu0 0
        %1077 = vmatpush1.bf16.msra.mxu0 %v1020
        %1078 = vmatprep.subr.bf16.mxu0 0
        %1079 = vmatpush1.bf16.msra.mxu0 %v1021
        %1080 = vmatprep.subr.bf16.mxu0 0
        %1081 = vmatpush1.bf16.msra.mxu0 %v1025
        %1082 = vmatprep.subr.bf16.mxu0 0
        %1083 = vmatpush1.bf16.msra.mxu0 %v1027
        %1084 = vmatprep.subr.bf16.mxu0 0
        %1085 = vmatpush1.bf16.msra.mxu0 %v1031
        %1086 = vmatprep.subr.bf16.mxu0 0
        %1087 = vmatpush1.bf16.msra.mxu0 %v1033
        %1088 = vmatprep.subr.bf16.mxu0 0
        %1089 = vmatpush1.bf16.msra.mxu0 0
        %1090 = vmatprep.subr.bf16.mxu0 0
        %1091 = vmatpush1.bf16.msra.mxu0 0
        %1092 = vmatprep.subr.bf16.mxu0 0
        %1093 = vmatpush1.bf16.msra.mxu0 0
        %1094 = vmatprep.subr.bf16.mxu0 0
        %1095 = vmatpush1.bf16.msra.mxu0 0
        %1096 = vmatprep.subr.bf16.mxu0 0
        %1097 = vmatpush1.bf16.msra.mxu0 0
        %1098 = vmatprep.subr.bf16.mxu0 0
        %1099 = vmatpush1.bf16.msra.mxu0 0
        %1100 = vmatprep.subr.bf16.mxu0 0
        %1101 = vmatpush1.bf16.msra.mxu0 0
        %1102 = vmatprep.subr.bf16.mxu0 0
        %1103 = vmatpush1.bf16.msra.mxu0 0
        %1104 = vmatprep.subr.bf16.mxu0 0
        %1105 = vmatpush1.bf16.msra.mxu0 0
        %1106 = vmatprep.subr.bf16.mxu0 0
        %1107 = vmatpush1.bf16.msra.mxu0 0
        %1108 = vmatprep.mubr.bf16.mxu0 0
        %1109 = vmatmul.mubr.bf16.gmra.mrb[0].mxu0 %v1065
        %v1110 = vpop.f32.mrb[0].mxu0
        %v1111 = vadd.f32 0.0, %v1110
        %v1112 = vpop.f32.mrb[0].mxu0
        %v1113 = vpop.f32.mrb[0].mxu0
        %v1114 = vadd.f32 0.0, %v1113
        %v1115 = vpop.f32.mrb[0].mxu0
        %1116 = vmatprep.mubr.bf16.mxu0 0
        %1117 = vmatmul.mubr.bf16.gmra.mrb[0].mxu0 %v1068
        %v1118 = vpop.f32.mrb[0].mxu0
        %v1119 = vadd.f32 0.0, %v1118
        %v1120 = vpop.f32.mrb[0].mxu0
        %v1121 = vpop.f32.mrb[0].mxu0
        %v1122 = vadd.f32 0.0, %v1121
        %v1123 = vpop.f32.mrb[0].mxu0
        %1124 = vmatprep.mubr.bf16.mxu0 0
        %1125 = vmatmul.mubr.bf16.gmra.mrb[0].mxu0 %v1071
        %v1126 = vpop.f32.mrb[0].mxu0
        %v1127 = vadd.f32 0.0, %v1126
        %v1128 = vpop.f32.mrb[0].mxu0
        %v1129 = vpop.f32.mrb[0].mxu0
        %v1130 = vadd.f32 0.0, %v1129
        %v1131 = vpop.f32.mrb[0].mxu0
        %1132 = vmatprep.mubr.bf16.mxu0 0
        %1133 = vmatmul.mubr.bf16.gmra.mrb[0].mxu0 %v1074
        %v1134 = vpop.f32.mrb[0].mxu0
        %v1135 = vadd.f32 0.0, %v1134
        %v1136 = vpop.f32.mrb[0].mxu0
        %v1137 = vpop.f32.mrb[0].mxu0
        %v1138 = vadd.f32 0.0, %v1137
        %v1139 = vpop.f32.mrb[0].mxu0
        %1140 = vdwg.mxu0
        %v1141 = vld [vmem:[%s10] sm:$0xff]
        %v1142 = vld [vmem:[%s10 + $0x8] sm:$0xff]
        %v1143 = vld [vmem:[%s10 + $0x10] sm:$0xff]
        %v1144 = vld [vmem:[%s10 + $0x18] sm:$0xff]
        %v1145 = vld [vmem:[%s10 + $0x20] sm:$0xff]
        %v1146 = vld [vmem:[%s10 + $0x28] sm:$0xff]
        %v1147 = vld [vmem:[%s10 + $0x30] sm:$0xff]
        %v1148 = vld [vmem:[%s10 + $0x38] sm:$0xff]
        %1150 = vset.pattern.permute.xlu0 0
        %1151 = vperm.xlu0 %1150, %v1141
        %v1152 = vpop.permute.xlu0 %1151
        %1155 = vset.pattern.permute.xlu0 0
        %1156 = vperm.xlu0 %1155, %v1142
        %v1157 = vpop.permute.xlu0 %1156
        %1160 = vset.pattern.permute.xlu0 0
        %1161 = vperm.xlu0 %1160, %v1143
        %v1162 = vpop.permute.xlu0 %1161
        %1165 = vset.pattern.permute.xlu0 0
        %1166 = vperm.xlu0 %1165, %v1144
        %v1167 = vpop.permute.xlu0 %1166
        %1170 = vset.pattern.permute.xlu0 0
        %1171 = vperm.xlu0 %1170, %v1145
        %v1172 = vpop.permute.xlu0 %1171
        %1175 = vset.pattern.permute.xlu0 0
        %1176 = vperm.xlu0 %1175, %v1146
        %v1177 = vpop.permute.xlu0 %1176
        %1180 = vset.pattern.permute.xlu0 0
        %1181 = vperm.xlu0 %1180, %v1147
        %v1182 = vpop.permute.xlu0 %1181
        %1185 = vset.pattern.permute.xlu0 0
        %1186 = vperm.xlu0 %1185, %v1148
        %v1187 = vpop.permute.xlu0 %1186
        %v1189 = vmul.f32 %v1111, %v1152
        %v1190 = vmul.f32 %v1114, %v1157
        %v1191 = vmul.f32 %v1119, %v1162
        %v1192 = vmul.f32 %v1122, %v1167
        %v1193 = vmul.f32 %v1127, %v1172
        %v1194 = vmul.f32 %v1130, %v1177
        %v1195 = vmul.f32 %v1135, %v1182
        %v1196 = vmul.f32 %v1138, %v1187
        %1197 = vset.pattern.permute.xlu0 1
        %1198 = vperm.xlu0 %1197, %v1141
        %v1199 = vpop.permute.xlu0 %1198
        %1201 = vset.pattern.permute.xlu0 1
        %1202 = vperm.xlu0 %1201, %v1142
        %v1203 = vpop.permute.xlu0 %1202
        %1205 = vset.pattern.permute.xlu0 1
        %1206 = vperm.xlu0 %1205, %v1143
        %v1207 = vpop.permute.xlu0 %1206
        %1209 = vset.pattern.permute.xlu0 1
        %1210 = vperm.xlu0 %1209, %v1144
        %v1211 = vpop.permute.xlu0 %1210
        %1213 = vset.pattern.permute.xlu0 1
        %1214 = vperm.xlu0 %1213, %v1145
        %v1215 = vpop.permute.xlu0 %1214
        %1217 = vset.pattern.permute.xlu0 1
        %1218 = vperm.xlu0 %1217, %v1146
        %v1219 = vpop.permute.xlu0 %1218
        %1221 = vset.pattern.permute.xlu0 1
        %1222 = vperm.xlu0 %1221, %v1147
        %v1223 = vpop.permute.xlu0 %1222
        %1225 = vset.pattern.permute.xlu0 1
        %1226 = vperm.xlu0 %1225, %v1148
        %v1227 = vpop.permute.xlu0 %1226
        %v1229 = vadd.f32 %v1189, %v1199
        %v1230 = vadd.f32 %v1190, %v1203
        %v1231 = vadd.f32 %v1191, %v1207
        %v1232 = vadd.f32 %v1192, %v1211
        %v1233 = vadd.f32 %v1193, %v1215
        %v1234 = vadd.f32 %v1194, %v1219
        %v1235 = vadd.f32 %v1195, %v1223
        %v1236 = vadd.f32 %v1196, %v1227
        %v1237 = vxor.u32 %v1229, 2147483648
        %v1238 = vxor.u32 %v1230, 2147483648
        %v1239 = vxor.u32 %v1231, 2147483648
        %v1240 = vxor.u32 %v1232, 2147483648
        %v1241 = vxor.u32 %v1233, 2147483648
        %v1242 = vxor.u32 %v1234, 2147483648
        %v1243 = vxor.u32 %v1235, 2147483648
        %v1244 = vxor.u32 %v1236, 2147483648
        %v1245 = vmul.f32 %v1237, 1.442695
        %v1246 = vpow.pop %v1245
        %v1247 = vmul.f32 %v1238, 1.442695
        %v1248 = vpow.pop %v1247
        %v1249 = vmul.f32 %v1239, 1.442695
        %v1250 = vpow.pop %v1249
        %v1251 = vmul.f32 %v1240, 1.442695
        %v1252 = vpow.pop %v1251
        %v1253 = vmul.f32 %v1241, 1.442695
        %v1254 = vpow.pop %v1253
        %v1255 = vmul.f32 %v1242, 1.442695
        %v1256 = vpow.pop %v1255
        %v1257 = vmul.f32 %v1243, 1.442695
        %v1258 = vpow.pop %v1257
        %v1259 = vmul.f32 %v1244, 1.442695
        %v1260 = vpow.pop %v1259
        %v1261 = vadd.f32 %v1246, 1.0
        %v1262 = vadd.f32 %v1248, 1.0
        %v1263 = vadd.f32 %v1250, 1.0
        %v1264 = vadd.f32 %v1252, 1.0
        %v1265 = vadd.f32 %v1254, 1.0
        %v1266 = vadd.f32 %v1256, 1.0
        %v1267 = vadd.f32 %v1258, 1.0
        %v1268 = vadd.f32 %v1260, 1.0
        %v1269 = vrcp.pop %v1261
        %v1270 = vmul.f32 1.0, %v1269
        %v1271 = vrcp.pop %v1262
        %v1272 = vmul.f32 1.0, %v1271
        %v1273 = vrcp.pop %v1263
        %v1274 = vmul.f32 1.0, %v1273
        %v1275 = vrcp.pop %v1264
        %v1276 = vmul.f32 1.0, %v1275
        %v1277 = vrcp.pop %v1265
        %v1278 = vmul.f32 1.0, %v1277
        %v1279 = vrcp.pop %v1266
        %v1280 = vmul.f32 1.0, %v1279
        %v1281 = vrcp.pop %v1267
        %v1282 = vmul.f32 1.0, %v1281
        %v1283 = vrcp.pop %v1268
        %v1284 = vmul.f32 1.0, %v1283
        %v1285 = vmul.f32 %v1229, %v1270
        %v1286 = vmul.f32 %v1230, %v1272
        %v1287 = vmul.f32 %v1231, %v1274
        %v1288 = vmul.f32 %v1232, %v1276
        %v1289 = vmul.f32 %v1233, %v1278
        %v1290 = vmul.f32 %v1234, %v1280
        %v1291 = vmul.f32 %v1235, %v1282
        %v1292 = vmul.f32 %v1236, %v1284
        %v1293 = vpack.c.bf16 %v1286, %v1285
        %v1294 = vpack.c.bf16 %v1288, %v1287
        %v1295 = vpack.c.bf16 %v1290, %v1289
        %v1296 = vpack.c.bf16 %v1292, %v1291
        %1301 = vrot.lane.b32.xlu0 %v1293, 127
        %v1302 = vpop.permute.xlu0 %1301
        %1303 = vrot.lane.b32.xlu0 %v1294, 127
        %v1304 = vpop.permute.xlu0 %1303
        %1305 = vrot.lane.b32.xlu0 %v1295, 127
        %v1306 = vpop.permute.xlu0 %1305
        %1307 = vrot.lane.b32.xlu0 %v1296, 127
        %v1308 = vpop.permute.xlu0 %1307
        %1313 = vrot.lane.b32.xlu0 %v1293, 126
        %v1314 = vpop.permute.xlu0 %1313
        %1315 = vrot.lane.b32.xlu0 %v1294, 126
        %v1316 = vpop.permute.xlu0 %1315
        %1317 = vrot.lane.b32.xlu0 %v1295, 126
        %v1318 = vpop.permute.xlu0 %1317
        %1319 = vrot.lane.b32.xlu0 %v1296, 126
        %v1320 = vpop.permute.xlu0 %1319
        %v1325 = vld [vmem:[%s11] sm:$0xff]
        %v1326 = vld [vmem:[%s11 + $0x8] sm:$0xff]
        %v1327 = vld [vmem:[%s11 + $0x10] sm:$0xff]
        %v1328 = vld [vmem:[%s11 + $0x18] sm:$0xff]
        %v1329 = vld [vmem:[%s11 + $0x20] sm:$0xff]
        %v1330 = vld [vmem:[%s11 + $0x28] sm:$0xff]
        %v1331 = vld [vmem:[%s11 + $0x30] sm:$0xff]
        %v1332 = vld [vmem:[%s11 + $0x38] sm:$0xff]
        %v1341 = vunpack.c.l.b16 %v1325
        %v1342 = vunpack.c.h.b16 %v1325
        %v1343 = vunpack.c.l.b16 %v1326
        %v1344 = vunpack.c.h.b16 %v1326
        %v1345 = vunpack.c.l.b16 %v1327
        %v1346 = vunpack.c.h.b16 %v1327
        %v1347 = vunpack.c.l.b16 %v1328
        %v1348 = vunpack.c.h.b16 %v1328
        %v1349 = vunpack.c.l.b16 %v1329
        %v1350 = vunpack.c.h.b16 %v1329
        %v1351 = vunpack.c.l.b16 %v1330
        %v1352 = vunpack.c.h.b16 %v1330
        %v1353 = vunpack.c.l.b16 %v1331
        %v1354 = vunpack.c.h.b16 %v1331
        %v1355 = vunpack.c.l.b16 %v1332
        %v1356 = vunpack.c.h.b16 %v1332
        %v1357 = vpack.c.b16 %v1343, %v1341
        %v1358 = vpack.c.b16 %v1344, %v1342
        %v1359 = vpack.c.b16 %v1347, %v1345
        %v1360 = vpack.c.b16 %v1348, %v1346
        %v1361 = vpack.c.b16 %v1351, %v1349
        %v1362 = vpack.c.b16 %v1352, %v1350
        %v1363 = vpack.c.b16 %v1355, %v1353
        %v1364 = vpack.c.b16 %v1356, %v1354
        %vm1369 = vcmask 523264
        %v1371 = vsel %vm1369, %v1358, 0
        %v1374 = vsel %vm1369, %v1360, 0
        %v1377 = vsel %vm1369, %v1362, 0
        %v1380 = vsel %vm1369, %v1364, 0
        %1382 = vmatprep.subr.bf16.mxu0 0
        %1383 = vmatpush1.bf16.msra.mxu0 %v1293
        %1384 = vmatprep.subr.bf16.mxu0 0
        %1385 = vmatpush1.bf16.msra.mxu0 %v1294
        %1386 = vmatprep.subr.bf16.mxu0 0
        %1387 = vmatpush1.bf16.msra.mxu0 %v1295
        %1388 = vmatprep.subr.bf16.mxu0 0
        %1389 = vmatpush1.bf16.msra.mxu0 %v1296
        %1390 = vmatprep.subr.bf16.mxu0 0
        %1391 = vmatpush1.bf16.msra.mxu0 %v1302
        %1392 = vmatprep.subr.bf16.mxu0 0
        %1393 = vmatpush1.bf16.msra.mxu0 %v1304
        %1394 = vmatprep.subr.bf16.mxu0 0
        %1395 = vmatpush1.bf16.msra.mxu0 %v1306
        %1396 = vmatprep.subr.bf16.mxu0 0
        %1397 = vmatpush1.bf16.msra.mxu0 %v1308
        %1398 = vmatprep.subr.bf16.mxu0 0
        %1399 = vmatpush1.bf16.msra.mxu0 %v1314
        %1400 = vmatprep.subr.bf16.mxu0 0
        %1401 = vmatpush1.bf16.msra.mxu0 %v1316
        %1402 = vmatprep.subr.bf16.mxu0 0
        %1403 = vmatpush1.bf16.msra.mxu0 %v1318
        %1404 = vmatprep.subr.bf16.mxu0 0
        %1405 = vmatpush1.bf16.msra.mxu0 %v1320
        %1406 = vmatprep.subr.bf16.mxu0 0
        %1407 = vmatpush1.bf16.msra.mxu0 0
        %1408 = vmatprep.subr.bf16.mxu0 0
        %1409 = vmatpush1.bf16.msra.mxu0 0
        %1410 = vmatprep.subr.bf16.mxu0 0
        %1411 = vmatpush1.bf16.msra.mxu0 0
        %1412 = vmatprep.subr.bf16.mxu0 0
        %1413 = vmatpush1.bf16.msra.mxu0 0
        %1414 = vmatprep.mubr.bf16.mxu0 %v1371
        %1415 = vmatmul.mubr.bf16.gmra.mrb[0].mxu0 %v1357
        %v1416 = vpop.f32.mrb[0].mxu0
        %v1417 = vadd.f32 0.0, %v1416
        %v1418 = vpop.f32.mrb[0].mxu0
        %v1419 = vpop.f32.mrb[0].mxu0
        %v1420 = vadd.f32 0.0, %v1419
        %v1421 = vpop.f32.mrb[0].mxu0
        %1422 = vmatprep.mubr.bf16.mxu0 %v1374
        %1423 = vmatmul.mubr.bf16.gmra.mrb[0].mxu0 %v1359
        %v1424 = vpop.f32.mrb[0].mxu0
        %v1425 = vadd.f32 0.0, %v1424
        %v1426 = vpop.f32.mrb[0].mxu0
        %v1427 = vpop.f32.mrb[0].mxu0
        %v1428 = vadd.f32 0.0, %v1427
        %v1429 = vpop.f32.mrb[0].mxu0
        %1430 = vmatprep.mubr.bf16.mxu0 %v1377
        %1431 = vmatmul.mubr.bf16.gmra.mrb[0].mxu0 %v1361
        %v1432 = vpop.f32.mrb[0].mxu0
        %v1433 = vadd.f32 0.0, %v1432
        %v1434 = vpop.f32.mrb[0].mxu0
        %v1435 = vpop.f32.mrb[0].mxu0
        %v1436 = vadd.f32 0.0, %v1435
        %v1437 = vpop.f32.mrb[0].mxu0
        %1438 = vmatprep.mubr.bf16.mxu0 %v1380
        %1439 = vmatmul.mubr.bf16.gmra.mrb[0].mxu0 %v1363
        %v1440 = vpop.f32.mrb[0].mxu0
        %v1441 = vadd.f32 0.0, %v1440
        %v1442 = vpop.f32.mrb[0].mxu0
        %v1443 = vpop.f32.mrb[0].mxu0
        %v1444 = vadd.f32 0.0, %v1443
        %v1445 = vpop.f32.mrb[0].mxu0
        %1446 = vdwg.mxu0
        %v1447 = vld [vmem:[%s12] sm:$0xff]
        %v1448 = vld [vmem:[%s12 + $0x8] sm:$0xff]
        %v1449 = vld [vmem:[%s12 + $0x10] sm:$0xff]
        %v1450 = vld [vmem:[%s12 + $0x18] sm:$0xff]
        %v1451 = vld [vmem:[%s12 + $0x20] sm:$0xff]
        %v1452 = vld [vmem:[%s12 + $0x28] sm:$0xff]
        %v1453 = vld [vmem:[%s12 + $0x30] sm:$0xff]
        %v1454 = vld [vmem:[%s12 + $0x38] sm:$0xff]
        %1456 = vset.pattern.permute.xlu0 0
        %1457 = vperm.xlu0 %1456, %v1447
        %v1458 = vpop.permute.xlu0 %1457
        %1461 = vset.pattern.permute.xlu0 0
        %1462 = vperm.xlu0 %1461, %v1448
        %v1463 = vpop.permute.xlu0 %1462
        %1466 = vset.pattern.permute.xlu0 0
        %1467 = vperm.xlu0 %1466, %v1449
        %v1468 = vpop.permute.xlu0 %1467
        %1471 = vset.pattern.permute.xlu0 0
        %1472 = vperm.xlu0 %1471, %v1450
        %v1473 = vpop.permute.xlu0 %1472
        %1476 = vset.pattern.permute.xlu0 0
        %1477 = vperm.xlu0 %1476, %v1451
        %v1478 = vpop.permute.xlu0 %1477
        %1481 = vset.pattern.permute.xlu0 0
        %1482 = vperm.xlu0 %1481, %v1452
        %v1483 = vpop.permute.xlu0 %1482
        %1486 = vset.pattern.permute.xlu0 0
        %1487 = vperm.xlu0 %1486, %v1453
        %v1488 = vpop.permute.xlu0 %1487
        %1491 = vset.pattern.permute.xlu0 0
        %1492 = vperm.xlu0 %1491, %v1454
        %v1493 = vpop.permute.xlu0 %1492
        %v1495 = vmul.f32 %v1417, %v1458
        %v1496 = vmul.f32 %v1420, %v1463
        %v1497 = vmul.f32 %v1425, %v1468
        %v1498 = vmul.f32 %v1428, %v1473
        %v1499 = vmul.f32 %v1433, %v1478
        %v1500 = vmul.f32 %v1436, %v1483
        %v1501 = vmul.f32 %v1441, %v1488
        %v1502 = vmul.f32 %v1444, %v1493
        %1503 = vset.pattern.permute.xlu0 1
        %1504 = vperm.xlu0 %1503, %v1447
        %v1505 = vpop.permute.xlu0 %1504
        %1507 = vset.pattern.permute.xlu0 1
        %1508 = vperm.xlu0 %1507, %v1448
        %v1509 = vpop.permute.xlu0 %1508
        %1511 = vset.pattern.permute.xlu0 1
        %1512 = vperm.xlu0 %1511, %v1449
        %v1513 = vpop.permute.xlu0 %1512
        %1515 = vset.pattern.permute.xlu0 1
        %1516 = vperm.xlu0 %1515, %v1450
        %v1517 = vpop.permute.xlu0 %1516
        %1519 = vset.pattern.permute.xlu0 1
        %1520 = vperm.xlu0 %1519, %v1451
        %v1521 = vpop.permute.xlu0 %1520
        %1523 = vset.pattern.permute.xlu0 1
        %1524 = vperm.xlu0 %1523, %v1452
        %v1525 = vpop.permute.xlu0 %1524
        %1527 = vset.pattern.permute.xlu0 1
        %1528 = vperm.xlu0 %1527, %v1453
        %v1529 = vpop.permute.xlu0 %1528
        %1531 = vset.pattern.permute.xlu0 1
        %1532 = vperm.xlu0 %1531, %v1454
        %v1533 = vpop.permute.xlu0 %1532
        %v1535 = vadd.f32 %v1495, %v1505
        %v1536 = vadd.f32 %v1496, %v1509
        %v1537 = vadd.f32 %v1497, %v1513
        %v1538 = vadd.f32 %v1498, %v1517
        %v1539 = vadd.f32 %v1499, %v1521
        %v1540 = vadd.f32 %v1500, %v1525
        %v1541 = vadd.f32 %v1501, %v1529
        %v1542 = vadd.f32 %v1502, %v1533
        %v1543 = vxor.u32 %v1535, 2147483648
        %v1544 = vxor.u32 %v1536, 2147483648
        %v1545 = vxor.u32 %v1537, 2147483648
        %v1546 = vxor.u32 %v1538, 2147483648
        %v1547 = vxor.u32 %v1539, 2147483648
        %v1548 = vxor.u32 %v1540, 2147483648
        %v1549 = vxor.u32 %v1541, 2147483648
        %v1550 = vxor.u32 %v1542, 2147483648
        %v1551 = vmul.f32 %v1543, 1.442695
        %v1552 = vpow.pop %v1551
        %v1553 = vmul.f32 %v1544, 1.442695
        %v1554 = vpow.pop %v1553
        %v1555 = vmul.f32 %v1545, 1.442695
        %v1556 = vpow.pop %v1555
        %v1557 = vmul.f32 %v1546, 1.442695
        %v1558 = vpow.pop %v1557
        %v1559 = vmul.f32 %v1547, 1.442695
        %v1560 = vpow.pop %v1559
        %v1561 = vmul.f32 %v1548, 1.442695
        %v1562 = vpow.pop %v1561
        %v1563 = vmul.f32 %v1549, 1.442695
        %v1564 = vpow.pop %v1563
        %v1565 = vmul.f32 %v1550, 1.442695
        %v1566 = vpow.pop %v1565
        %v1567 = vadd.f32 %v1552, 1.0
        %v1568 = vadd.f32 %v1554, 1.0
        %v1569 = vadd.f32 %v1556, 1.0
        %v1570 = vadd.f32 %v1558, 1.0
        %v1571 = vadd.f32 %v1560, 1.0
        %v1572 = vadd.f32 %v1562, 1.0
        %v1573 = vadd.f32 %v1564, 1.0
        %v1574 = vadd.f32 %v1566, 1.0
        %v1575 = vrcp.pop %v1567
        %v1576 = vmul.f32 1.0, %v1575
        %v1577 = vrcp.pop %v1568
        %v1578 = vmul.f32 1.0, %v1577
        %v1579 = vrcp.pop %v1569
        %v1580 = vmul.f32 1.0, %v1579
        %v1581 = vrcp.pop %v1570
        %v1582 = vmul.f32 1.0, %v1581
        %v1583 = vrcp.pop %v1571
        %v1584 = vmul.f32 1.0, %v1583
        %v1585 = vrcp.pop %v1572
        %v1586 = vmul.f32 1.0, %v1585
        %v1587 = vrcp.pop %v1573
        %v1588 = vmul.f32 1.0, %v1587
        %v1589 = vrcp.pop %v1574
        %v1590 = vmul.f32 1.0, %v1589
        %v1591 = vmul.f32 %v1535, %v1576
        %v1592 = vmul.f32 %v1536, %v1578
        %v1593 = vmul.f32 %v1537, %v1580
        %v1594 = vmul.f32 %v1538, %v1582
        %v1595 = vmul.f32 %v1539, %v1584
        %v1596 = vmul.f32 %v1540, %v1586
        %v1597 = vmul.f32 %v1541, %v1588
        %v1598 = vmul.f32 %v1542, %v1590
        %v1599 = vpack.c.bf16 %v1592, %v1591
        %v1600 = vpack.c.bf16 %v1594, %v1593
        %v1601 = vpack.c.bf16 %v1596, %v1595
        %v1602 = vpack.c.bf16 %v1598, %v1597
        %v1603 = vld [vmem:[%s13] sm:$0xf]
        %v1604 = vld [vmem:[%s13 + $0x4] sm:$0xf]
        %v1605 = vld [vmem:[%s13 + $0x8] sm:$0xf]
        %v1606 = vld [vmem:[%s13 + $0xc] sm:$0xf]
        %v1607 = vld [vmem:[%s13 + $0x10] sm:$0xf]
        %v1608 = vld [vmem:[%s13 + $0x14] sm:$0xf]
        %v1609 = vld [vmem:[%s13 + $0x18] sm:$0xf]
        %v1610 = vld [vmem:[%s13 + $0x1c] sm:$0xf]
        %v1611 = vld [vmem:[%s13 + $0x20] sm:$0xf]
        %v1612 = vld [vmem:[%s13 + $0x24] sm:$0xf]
        %v1623 = vunpack.c.l.b16 %v1603
        %v1624 = vunpack.c.l.b16 %v1604
        %v1625 = vunpack.c.l.b16 %v1605
        %v1626 = vunpack.c.l.b16 %v1606
        %v1627 = vunpack.c.l.b16 %v1607
        %v1628 = vunpack.c.l.b16 %v1608
        %v1629 = vunpack.c.l.b16 %v1609
        %v1630 = vunpack.c.l.b16 %v1610
        %v1631 = vunpack.c.l.b16 %v1611
        %v1632 = vunpack.c.l.b16 %v1612
        %v1633 = vpack.c.b16 %v1624, %v1623
        %v1634 = vpack.c.b16 %v1626, %v1625
        %v1635 = vpack.c.b16 %v1628, %v1627
        %v1636 = vpack.c.b16 %v1630, %v1629
        %v1637 = vpack.c.b16 %v1632, %v1631
        %v1644 = vsel %vm621, %v1599, 0
        %v1647 = vsel %vm621, %v1600, 0
        %v1650 = vsel %vm621, %v1601, 0
        %v1653 = vsel %vm621, %v1602, 0
        %1655 = vmatprep.subr.bf16.mxu0 0
        %1656 = vmatpush1.bf16.msra.mxu0 %v1633
        %1657 = vmatprep.subr.bf16.mxu0 0
        %1658 = vmatpush1.bf16.msra.mxu0 %v1634
        %1659 = vmatprep.subr.bf16.mxu0 0
        %1660 = vmatpush1.bf16.msra.mxu0 %v1635
        %1661 = vmatprep.subr.bf16.mxu0 0
        %1662 = vmatpush1.bf16.msra.mxu0 %v1636
        %1663 = vmatprep.subr.bf16.mxu0 0
        %1664 = vmatpush1.bf16.msra.mxu0 %v1637
        %1665 = vmatprep.subr.bf16.mxu0 0
        %1666 = vmatpush1.bf16.msra.mxu0 0
        %1667 = vmatprep.subr.bf16.mxu0 0
        %1668 = vmatpush1.bf16.msra.mxu0 0
        %1669 = vmatprep.subr.bf16.mxu0 0
        %1670 = vmatpush1.bf16.msra.mxu0 0
        %1671 = vmatprep.subr.bf16.mxu0 0
        %1672 = vmatpush1.bf16.msra.mxu0 0
        %1673 = vmatprep.subr.bf16.mxu0 0
        %1674 = vmatpush1.bf16.msra.mxu0 0
        %1675 = vmatprep.subr.bf16.mxu0 0
        %1676 = vmatpush1.bf16.msra.mxu0 0
        %1677 = vmatprep.subr.bf16.mxu0 0
        %1678 = vmatpush1.bf16.msra.mxu0 0
        %1679 = vmatprep.subr.bf16.mxu0 0
        %1680 = vmatpush1.bf16.msra.mxu0 0
        %1681 = vmatprep.subr.bf16.mxu0 0
        %1682 = vmatpush1.bf16.msra.mxu0 0
        %1683 = vmatprep.subr.bf16.mxu0 0
        %1684 = vmatpush1.bf16.msra.mxu0 0
        %1685 = vmatprep.subr.bf16.mxu0 0
        %1686 = vmatpush1.bf16.msra.mxu0 0
        %1687 = vmatprep.mubr.bf16.mxu0 0
        %1688 = vmatmul.mubr.bf16.gmra.mrb[0].mxu0 %v1644
        %v1689 = vpop.f32.mrb[0].mxu0
        %v1690 = vadd.f32 0.0, %v1689
        %v1691 = vpop.f32.mrb[0].mxu0
        %v1692 = vpop.f32.mrb[0].mxu0
        %v1693 = vadd.f32 0.0, %v1692
        %v1694 = vpop.f32.mrb[0].mxu0
        %1695 = vmatprep.mubr.bf16.mxu0 0
        %1696 = vmatmul.mubr.bf16.gmra.mrb[0].mxu0 %v1647
        %v1697 = vpop.f32.mrb[0].mxu0
        %v1698 = vadd.f32 0.0, %v1697
        %v1699 = vpop.f32.mrb[0].mxu0
        %v1700 = vpop.f32.mrb[0].mxu0
        %v1701 = vadd.f32 0.0, %v1700
        %v1702 = vpop.f32.mrb[0].mxu0
        %1703 = vmatprep.mubr.bf16.mxu0 0
        %1704 = vmatmul.mubr.bf16.gmra.mrb[0].mxu0 %v1650
        %v1705 = vpop.f32.mrb[0].mxu0
        %v1706 = vadd.f32 0.0, %v1705
        %v1707 = vpop.f32.mrb[0].mxu0
        %v1708 = vpop.f32.mrb[0].mxu0
        %v1709 = vadd.f32 0.0, %v1708
        %v1710 = vpop.f32.mrb[0].mxu0
        %1711 = vmatprep.mubr.bf16.mxu0 0
        %1712 = vmatmul.mubr.bf16.gmra.mrb[0].mxu0 %v1653
        %v1713 = vpop.f32.mrb[0].mxu0
        %v1714 = vadd.f32 0.0, %v1713
        %v1715 = vpop.f32.mrb[0].mxu0
        %v1716 = vpop.f32.mrb[0].mxu0
        %v1717 = vadd.f32 0.0, %v1716
        %v1718 = vpop.f32.mrb[0].mxu0
        %1719 = vdwg.mxu0
        %1720 = vst.msk [vmem:[%s456] sm:$0xff] %vm1369, %v1690
        %1721 = vst.msk [vmem:[%s456 + $0x8] sm:$0xff] %vm1369, %v1693
        %1722 = vst.msk [vmem:[%s456 + $0x10] sm:$0xff] %vm1369, %v1698
        %1723 = vst.msk [vmem:[%s456 + $0x18] sm:$0xff] %vm1369, %v1701
        %1724 = vst.msk [vmem:[%s456 + $0x20] sm:$0xff] %vm1369, %v1706
        %1725 = vst.msk [vmem:[%s456 + $0x28] sm:$0xff] %vm1369, %v1709
        %1726 = vst.msk [vmem:[%s456 + $0x30] sm:$0xff] %vm1369, %v1714
        %1727 = vst.msk [vmem:[%s456 + $0x38] sm:$0xff] %vm1369, %v1717
        %s1728 = sand.u32 %s335, 1
        %s1729 = scalar_lea.sflag [#allocation3], %s1728
        %s1730 = sand.u32 %s335, 1
        %s1731 = smul.addr %s1730, 64
        %s1732 = scalar_lea.vmem [#allocation2], %s1731
        // Predicated region
        $region77: #{tpu_custom_call.1} parent=75 // pred_check
          %p1733 = pneg %p345
        $region78: #{tpu_custom_call.1} parent=75 // pred_check_branch
          %1735 = sbr.rel (%p1733) target = $region80
        $region79: #{tpu_custom_call.1} parent=75 // pred_region
          %s1737 = ssub.s32 1024, 1024
          %1738 = vsyncadd %s1729, %s1737
          %s1739 = smul.addr %s28, 8
          %s1740 = smul.addr %s1739, 128
          %s1741 = scalar_lea.hbm %s14, %s1740
          %s1742 = sshll.u32 %s1732, 4
          %s1743 = int_to_ptr.vmem [resolvable:$true] %s1742
          %1748 = dma.vmem_to_hbm [thread:$0]  %s1743, 1024, %s1741, %s1729, 128, 128, 8
        $region80: #{tpu_custom_call.1} parent=75 // pred_fallthru
          _
      $region76: #{tpu_custom_call.1} parent=5 // pred_fallthru
        _
      %p1749 = scmp.le.s32.totalorder 2, %s23
      // Predicated region
      $region81: #{tpu_custom_call.1} parent=5 // pred_check
        %p1750 = pneg %p1749
      $region82: #{tpu_custom_call.1} parent=5 // pred_check_branch
        %1752 = sbr.rel (%p1750) target = $region84
      $region83: #{tpu_custom_call.1} parent=5 // pred_region
        %s1753 = ssub.s32 %s23, 2
        // Predicated region
        $region85: #{tpu_custom_call.1} parent=83 // pred_check
          %p1754 = pneg %p351
        $region86: #{tpu_custom_call.1} parent=83 // pred_check_branch
          %1756 = sbr.rel (%p1754) target = $region88
        $region87: #{tpu_custom_call.1} parent=83 // pred_region
          %s1757 = sand.u32 %s336, 1
          %s1758 = scalar_lea.sflag [#allocation3], %s1757
          %s1759 = sand.u32 %s336, 1
          %s1760 = smul.addr %s1759, 64
          %s1761 = scalar_lea.vmem [#allocation2], %s1760
          %1762 = dma.done %s1758, 1024
        $region88: #{tpu_custom_call.1} parent=83 // pred_fallthru
          _
      $region84: #{tpu_custom_call.1} parent=5 // pred_fallthru
        _
    $region6: #{tpu_custom_call.1} parent=1 // loop_footer
      %s27 = sadd.s32 1, %s23
    $region7: #{tpu_custom_call.1} parent=1 // loop_footer_branch
      %22 = sbr.rel target = $region3
    $region8: #{tpu_custom_call.1} parent=1 // loop_exit
      _
    %1763 = vsyncpa [#allocation3], 1
    %s1764 = scalar_lea.sflag [#allocation3], 1
    %1765 = vsyncpa %s1764, 1

</llo_original>
